<compile_context>
chip_gen: v5e
topology: v5e:2x2
jax: 0.10.0
libtpu: 0.0.40
codegen_flags: <defaults>
</compile_context>

<pallas_src>
import numpy as np
import jax
import jax.numpy as jnp
from jax.experimental import pallas as pl
from jax.experimental.pallas import tpu as pltpu

# ----------------------------- config ---------------------------------------
B = 2            # batch
CIN = 16         # inp_channels
COUT = 32        # out_channels
E = 32           # time_embed_dim
H = 16           # horizon
K = 5            # kernel_size
PAD = K // 2
NG = 8           # GroupNorm groups (diffuser Conv1dBlock default)
GSIZE = COUT // NG
EPS = 1e-5
BH = B * H
_SHIFT_TAPS = (0, 1, 3, 4)        # tap k=2 (d=0) is the identity shift


# ----------------------------- packed-constant layout ------------------------
def _make_layout():
    layout = {}
    off = 0

    def add(name, rows, cols):
        nonlocal off
        layout[name] = (off, rows, cols)
        off += -(-rows // 8) * 8                      # 8-row (sublane) aligned

    add("w1s", (K + 1) * COUT, CIN)                   # conv0 taps (transposed) + residual 1x1
    add("w2s", K * COUT, COUT)                        # conv1 taps (transposed)
    add("wtT", COUT, E)                               # time Linear (transposed)
    for k in _SHIFT_TAPS:
        add(f"st{k}", BH, BH)                         # per-tap shift selectors S_k^T
    add("gsel", NG, COUT)                             # group one-hot (sum over channels)
    add("gt2", 2 * COUT, 2 * NG)                      # blockdiag(GselT, GselT)
    add("seg", B, BH)                                 # batch segment one-hot (broadcast)
    add("segT", BH, B)                                # its transpose (reduce over positions)
    for n in ("b1", "g1", "be1", "b2", "g2", "be2", "bt", "br"):
        add(n, COUT, 1)                               # per-channel columns
    return layout, off


_LAYOUT, _ROWS = _make_layout()                       # (880, 32) packed constants


# ----------------------------- mish ------------------------------------------
def _mish(x):
    # mish(x) = x * tanh(softplus(x)) = x * (e^2 + 2e) / (e^2 + 2e + 2),  e = exp(x)
    # single transcendental instead of exp + log1p + tanh.
    e = jnp.exp(jnp.minimum(x, 20.0))
    n = e * e + 2.0 * e
    return jnp.where(x > 20.0, x, x * n / (n + 2.0))


def _mish_ref(x):
    # classic form (matches PyTorch nn.Mish) -- used only by the pure-JAX reference.
    sp = jnp.where(x > 20.0, x, jnp.log1p(jnp.exp(jnp.minimum(x, 20.0))))
    return x * jnp.tanh(sp)


# ----------------------------- kernel -----------------------------------------
def _kernel(x_ref, tT_ref, pk_ref, o_ref):
    f32 = jnp.float32

    def blk(name):
        o, r, c = _LAYOUT[name]
        return pk_ref[o:o + r, 0:c]

    def dot(a, b):
        return jnp.dot(a, b, preferred_element_type=f32)

    # ---- constants / selectors -----------------------------------------------
    seg = blk("seg")                                  # (B, BH)   broadcast over positions
    segT = blk("segT")                                # (BH, B)   reduce over positions
    gsel = blk("gsel")                                # (NG, COUT)
    gt2 = blk("gt2")                                  # (2*COUT, 2*NG)
    sts = {k: blk(f"st{k}") for k in _SHIFT_TAPS}     # (BH, BH) shift selectors
    b1c, g1c, be1c = blk("b1"), blk("g1"), blk("be1")  # (COUT, 1)
    b2c, g2c, be2c = blk("b2"), blk("g2"), blk("be2")
    btc, brc = blk("bt"), blk("br")

    # ---- input: (B, CIN, H) -> (CIN, B*H); channels on sublanes ----------------
    xcat = jnp.concatenate([x_ref[0], x_ref[1]], axis=1).astype(f32)   # (CIN, BH)

    # ---- conv0 + residual 1x1: one channel-mix matmul + 4 shift matmuls --------
    P = dot(blk("w1s"), xcat)                          # ((K+1)*COUT, BH) = (192, 32)
    u0 = P[PAD * COUT:(PAD + 1) * COUT, :]             # d = 0 tap (identity shift)
    for k in _SHIFT_TAPS:
        u0 = u0 + dot(P[k * COUT:(k + 1) * COUT, :], sts[k])
    u0 = u0 + b1c                                      # conv0 bias
    res = P[K * COUT:(K + 1) * COUT, :] + brc          # residual 1x1 conv

    # ---- time embedding (column orientation): Wt^T @ Mish(t^T) + bt ------------
    temb = dot(blk("wtT"), _mish(tT_ref[...].astype(f32))) + btc       # (COUT, B)

    # ---- GroupNorm: selector-matmul stats, affine folded at group level --------
    inv_n = 1.0 / float(GSIZE * H)

    def gn_affine(u, gammac, betac):
        su = dot(gsel, u)                              # (NG, BH)   per-group channel sums
        su2 = dot(gsel, u * u)
        stats = dot(jnp.concatenate([su, su2], axis=0), segT) * inv_n  # (2*NG, B)
        mean = stats[:NG]
        var = stats[NG:] - mean * mean
        inv = jax.lax.rsqrt(var + EPS)                 # (NG, B)
        ab = dot(gt2, jnp.concatenate([inv, mean * inv], axis=0))      # (2*COUT, B)
        a = ab[:COUT] * gammac                         # per-channel scale
        b = betac - ab[COUT:] * gammac                 # per-channel shift
        return a, b

    # ---- block 0: conv -> GN -> Mish, then + time embedding --------------------
    a0, b0 = gn_affine(u0, g1c, be1c)
    bc0 = dot(jnp.concatenate([a0, b0, temb], axis=0), seg)            # (3*COUT, BH)
    y1 = _mish(u0 * bc0[:COUT] + bc0[COUT:2 * COUT]) + bc0[2 * COUT:]

    # ---- block 1: conv -> GN -> Mish -------------------------------------------
    P2 = dot(blk("w2s"), y1)                           # (K*COUT, BH) = (160, 32)
    u2 = P2[PAD * COUT:(PAD + 1) * COUT, :]
    for k in _SHIFT_TAPS:
        u2 = u2 + dot(P2[k * COUT:(k + 1) * COUT, :], sts[k])
    u2 = u2 + b2c
    a1, b1aff = gn_affine(u2, g2c, be2c)
    bc1 = dot(jnp.concatenate([a1, b1aff], axis=0), seg)               # (2*COUT, BH)
    final = _mish(u2 * bc1[:COUT] + bc1[COUT:]) + res                  # (COUT, BH)

    # ---- write (B, COUT, H) directly: no wrapper transpose ----------------------
    o_ref[0, :, :] = final[:, 0:H].astype(o_ref.dtype)
    o_ref[1, :, :] = final[:, H:2 * H].astype(o_ref.dtype)


@jax.jit
def residual_temporal_block(x_nch, t, packed):
    """x_nch: [B, CIN, H], t: [B, E] -> [B, COUT, H] (matches PyTorch forward)."""
    tT = jnp.transpose(t)                              # (E, B); 256 B -- only boundary op left
    return pl.pallas_call(
        _kernel,
        out_shape=jax.ShapeDtypeStruct((B, COUT, H), jnp.float32),
        grid=(1,),
        in_specs=[
            pl.BlockSpec((B, CIN, H), lambda i: (0, 0, 0)),   # x, native NCH layout
            pl.BlockSpec((E, B), lambda i: (0, 0)),           # t^T
            pl.BlockSpec((_ROWS, 32), lambda i: (0, 0)),      # packed weights + selectors
        ],
        out_specs=pl.BlockSpec((B, COUT, H), lambda i: (0, 0, 0)),
        compiler_params=pltpu.CompilerParams(
            dimension_semantics=("arbitrary",)),
    )(x_nch, tT, packed)


# ----------------------------- host-side packing -----------------------------
def pack_params(p):
    pk = np.zeros((_ROWS, 32), np.float32)

    def put(name, arr):
        o, r, c = _LAYOUT[name]
        pk[o:o + r, :c] = np.asarray(arr, np.float32)

    w1 = np.asarray(p["w1"], np.float32)               # (K, CIN, COUT)
    w2 = np.asarray(p["w2"], np.float32)               # (K, COUT, COUT)

    w1s = np.zeros(((K + 1) * COUT, CIN), np.float32)
    for k in range(K):
        w1s[k * COUT:(k + 1) * COUT] = w1[k].T         # (COUT, CIN)
    w1s[K * COUT:] = np.asarray(p["wr"], np.float32).T # residual 1x1 conv
    put("w1s", w1s)

    put("w2s", np.concatenate([w2[k].T for k in range(K)], axis=0))
    put("wtT", np.asarray(p["wt"], np.float32).T)

    q = np.arange(BH)[:, None]
    r = np.arange(BH)[None, :]
    for k in _SHIFT_TAPS:
        d = k - PAD
        st = ((q == r + d) & (q // H == r // H)).astype(np.float32)    # S_k^T
        put(f"st{k}", st)

    gsel = (np.arange(COUT)[None, :] // GSIZE == np.arange(NG)[:, None]).astype(np.float32)
    put("gsel", gsel)
    gt2 = np.zeros((2 * COUT, 2 * NG), np.float32)
    gt2[:COUT, :NG] = gsel.T
    gt2[COUT:, NG:] = gsel.T
    put("gt2", gt2)

    seg = (np.arange(BH)[None, :] // H == np.arange(B)[:, None]).astype(np.float32)
    put("seg", seg)
    put("segT", seg.T)

    for name in ("b1", "g1", "be1", "b2", "g2", "be2", "bt", "br"):
        put(name, np.asarray(p[name], np.float32).reshape(COUT, 1))

    return jnp.asarray(pk)


# ----------------------------- pure-JAX reference ----------------------------
def _ref_forward(x_nch, t, p):
    x = jnp.transpose(x_nch, (0, 2, 1))                # (B, H, CIN)

    def conv_gn_mish(z, w, b, gamma, beta):
        zp = jnp.pad(z, ((0, 0), (PAD, PAD), (0, 0)))
        y = sum(jnp.einsum("bhc,cd->bhd", zp[:, k:k + H, :], w[k])
                for k in range(K)) + b
        yr = y.reshape(B, H, NG, GSIZE)
        m = jnp.mean(yr, axis=(1, 3), keepdims=True)
        v = jnp.mean((yr - m) ** 2, axis=(1, 3), keepdims=True)
        y = ((yr - m) / jnp.sqrt(v + EPS)).reshape(B, H, COUT) * gamma + beta
        return _mish_ref(y)

    y = conv_gn_mish(x, p["w1"], p["b1"], p["g1"], p["be1"])
    temb = jnp.dot(_mish_ref(t), p["wt"]) + p["bt"]
    y = y + temb[:, None, :]
    y = conv_gn_mish(y, p["w2"], p["b2"], p["g2"], p["be2"])
    res = jnp.einsum("bhc,cd->bhd", x, p["wr"]) + p["br"]
    return jnp.transpose(y + res, (0, 2, 1))


# ----------------------------- main ------------------------------------------
if __name__ == "__main__":
    key = jax.random.PRNGKey(0)
    ks = jax.random.split(key, 16)

    def rnd(k, shape, scale=0.1):
        return (scale * jax.random.normal(k, shape)).astype(jnp.float32)

    params = {
        "w1": rnd(ks[0], (K, CIN, COUT)),
        "b1": rnd(ks[1], (1, COUT)),
        "g1": jnp.ones((1, COUT), jnp.float32),
        "be1": jnp.zeros((1, COUT), jnp.float32),
        "w2": rnd(ks[2], (K, COUT, COUT)),
        "b2": rnd(ks[3], (1, COUT)),
        "g2": jnp.ones((1, COUT), jnp.float32),
        "be2": jnp.zeros((1, COUT), jnp.float32),
        "wt": rnd(ks[4], (E, COUT)),
        "bt": rnd(ks[5], (1, COUT)),
        "wr": rnd(ks[6], (CIN, COUT)),
        "br": rnd(ks[7], (1, COUT)),
    }

    x = jax.random.normal(ks[8], (B, CIN, H), jnp.float32)   # [batch, inp_channels, horizon]
    t = jax.random.normal(ks[9], (B, E), jnp.float32)        # [batch, time_embed_dim]

    packed = pack_params(params)

    out = jax.block_until_ready(residual_temporal_block(x, t, packed))
    ref = jax.block_until_ready(_ref_forward(x, t, params))

    assert out.shape == (B, COUT, H)
    np.testing.assert_allclose(np.asarray(out), np.asarray(ref), rtol=1e-4, atol=1e-4)
    print("KERNEL_OK")
</pallas_src>

<mosaic_0001>
module attributes {stable_mosaic.version = 11 : i64} {
  func.func @_kernel(%arg0: i32, %arg1: memref<2x16x16xf32, #tpu.memory_space<vmem>>, %arg2: memref<32x2xf32, #tpu.memory_space<vmem>>, %arg3: memref<880x32xf32, #tpu.memory_space<vmem>>, %arg4: memref<2x32x16xf32, #tpu.memory_space<vmem>>) attributes {dimension_semantics = [#tpu.dimension_semantics<arbitrary>], iteration_bounds = array<i64: 1>, scalar_prefetch = 0 : i64, scratch_operands = 0 : i64, tpu.core_type = #tpu.core_type<tc>, window_params = [{pipeline_mode = #tpu.pipeline_mode<synchronous>, transform_indices = @transform_0, window_bounds = array<i64: 2, 16, 16>}, {pipeline_mode = #tpu.pipeline_mode<synchronous>, transform_indices = @transform_1, window_bounds = array<i64: 32, 2>}, {pipeline_mode = #tpu.pipeline_mode<synchronous>, transform_indices = @transform_2, window_bounds = array<i64: 880, 32>}, {pipeline_mode = #tpu.pipeline_mode<synchronous>, transform_indices = @transform_3, window_bounds = array<i64: 2, 32, 16>}]} {
    %c584 = arith.constant 584 : index
    %c0 = arith.constant 0 : index
    %0 = vector.load %arg3[%c584, %c0] : memref<880x32xf32, #tpu.memory_space<vmem>>, vector<2x32xf32>
    %c592 = arith.constant 592 : index
    %c0_0 = arith.constant 0 : index
    %1 = vector.load %arg3[%c592, %c0_0] : memref<880x32xf32, #tpu.memory_space<vmem>>, vector<32x2xf32>
    %c512 = arith.constant 512 : index
    %c0_1 = arith.constant 0 : index
    %2 = vector.load %arg3[%c512, %c0_1] : memref<880x32xf32, #tpu.memory_space<vmem>>, vector<8x32xf32>
    %c520 = arith.constant 520 : index
    %c0_2 = arith.constant 0 : index
    %3 = vector.load %arg3[%c520, %c0_2] : memref<880x32xf32, #tpu.memory_space<vmem>>, vector<64x16xf32>
    %c384 = arith.constant 384 : index
    %c0_3 = arith.constant 0 : index
    %4 = vector.load %arg3[%c384, %c0_3] : memref<880x32xf32, #tpu.memory_space<vmem>>, vector<32x32xf32>
    %c416 = arith.constant 416 : index
    %c0_4 = arith.constant 0 : index
    %5 = vector.load %arg3[%c416, %c0_4] : memref<880x32xf32, #tpu.memory_space<vmem>>, vector<32x32xf32>
    %c448 = arith.constant 448 : index
    %c0_5 = arith.constant 0 : index
    %6 = vector.load %arg3[%c448, %c0_5] : memref<880x32xf32, #tpu.memory_space<vmem>>, vector<32x32xf32>
    %c480 = arith.constant 480 : index
    %c0_6 = arith.constant 0 : index
    %7 = vector.load %arg3[%c480, %c0_6] : memref<880x32xf32, #tpu.memory_space<vmem>>, vector<32x32xf32>
    %c624 = arith.constant 624 : index
    %c0_7 = arith.constant 0 : index
    %8 = vector.load %arg3[%c624, %c0_7] : memref<880x32xf32, #tpu.memory_space<vmem>>, vector<32x1xf32>
    %c656 = arith.constant 656 : index
    %c0_8 = arith.constant 0 : index
    %9 = vector.load %arg3[%c656, %c0_8] : memref<880x32xf32, #tpu.memory_space<vmem>>, vector<32x1xf32>
    %c688 = arith.constant 688 : index
    %c0_9 = arith.constant 0 : index
    %10 = vector.load %arg3[%c688, %c0_9] : memref<880x32xf32, #tpu.memory_space<vmem>>, vector<32x1xf32>
    %c720 = arith.constant 720 : index
    %c0_10 = arith.constant 0 : index
    %11 = vector.load %arg3[%c720, %c0_10] : memref<880x32xf32, #tpu.memory_space<vmem>>, vector<32x1xf32>
    %c752 = arith.constant 752 : index
    %c0_11 = arith.constant 0 : index
    %12 = vector.load %arg3[%c752, %c0_11] : memref<880x32xf32, #tpu.memory_space<vmem>>, vector<32x1xf32>
    %c784 = arith.constant 784 : index
    %c0_12 = arith.constant 0 : index
    %13 = vector.load %arg3[%c784, %c0_12] : memref<880x32xf32, #tpu.memory_space<vmem>>, vector<32x1xf32>
    %c816 = arith.constant 816 : index
    %c0_13 = arith.constant 0 : index
    %14 = vector.load %arg3[%c816, %c0_13] : memref<880x32xf32, #tpu.memory_space<vmem>>, vector<32x1xf32>
    %c848 = arith.constant 848 : index
    %c0_14 = arith.constant 0 : index
    %15 = vector.load %arg3[%c848, %c0_14] : memref<880x32xf32, #tpu.memory_space<vmem>>, vector<32x1xf32>
    %c0_15 = arith.constant 0 : index
    %c0_16 = arith.constant 0 : index
    %c0_17 = arith.constant 0 : index
    %16 = vector.load %arg1[%c0_15, %c0_16, %c0_17] : memref<2x16x16xf32, #tpu.memory_space<vmem>>, vector<1x16x16xf32>
    %17 = vector.shape_cast %16 : vector<1x16x16xf32> to vector<16x16xf32>
    %c1 = arith.constant 1 : index
    %c0_18 = arith.constant 0 : index
    %c0_19 = arith.constant 0 : index
    %18 = vector.load %arg1[%c1, %c0_18, %c0_19] : memref<2x16x16xf32, #tpu.memory_space<vmem>>, vector<1x16x16xf32>
    %19 = vector.shape_cast %18 : vector<1x16x16xf32> to vector<16x16xf32>
    %20 = tpu.concatenate %17, %19 in 1 : vector<16x16xf32>, vector<16x16xf32> -> vector<16x32xf32>
    %c0_20 = arith.constant 0 : index
    %c0_21 = arith.constant 0 : index
    %21 = vector.load %arg3[%c0_20, %c0_21] : memref<880x32xf32, #tpu.memory_space<vmem>>, vector<192x16xf32>
    %cst = arith.constant dense<0.000000e+00> : vector<192x32xf32>
    %22 = tpu.matmul %21, %20, %cst {dimension_numbers = #tpu.dot_dimension_numbers<[1], [0], [0], [1], [0, 0, 1, 1], [], []>} : vector<192x16xf32>, vector<16x32xf32>, vector<192x32xf32> -> vector<192x32xf32>
    %23 = vector.extract_strided_slice %22 {offsets = [64, 0], sizes = [32, 32], strides = [1, 1]} : vector<192x32xf32> to vector<32x32xf32>
    %24 = vector.extract_strided_slice %22 {offsets = [0, 0], sizes = [32, 32], strides = [1, 1]} : vector<192x32xf32> to vector<32x32xf32>
    %cst_22 = arith.constant dense<0.000000e+00> : vector<32x32xf32>
    %25 = tpu.matmul %24, %4, %cst_22 {dimension_numbers = #tpu.dot_dimension_numbers<[1], [0], [0], [1], [0, 0, 1, 1], [], []>} : vector<32x32xf32>, vector<32x32xf32>, vector<32x32xf32> -> vector<32x32xf32>
    %26 = arith.addf %23, %25 : vector<32x32xf32>
    %27 = vector.extract_strided_slice %22 {offsets = [32, 0], sizes = [32, 32], strides = [1, 1]} : vector<192x32xf32> to vector<32x32xf32>
    %cst_23 = arith.constant dense<0.000000e+00> : vector<32x32xf32>
    %28 = tpu.matmul %27, %5, %cst_23 {dimension_numbers = #tpu.dot_dimension_numbers<[1], [0], [0], [1], [0, 0, 1, 1], [], []>} : vector<32x32xf32>, vector<32x32xf32>, vector<32x32xf32> -> vector<32x32xf32>
    %29 = arith.addf %26, %28 : vector<32x32xf32>
    %30 = vector.extract_strided_slice %22 {offsets = [96, 0], sizes = [32, 32], strides = [1, 1]} : vector<192x32xf32> to vector<32x32xf32>
    %cst_24 = arith.constant dense<0.000000e+00> : vector<32x32xf32>
    %31 = tpu.matmul %30, %6, %cst_24 {dimension_numbers = #tpu.dot_dimension_numbers<[1], [0], [0], [1], [0, 0, 1, 1], [], []>} : vector<32x32xf32>, vector<32x32xf32>, vector<32x32xf32> -> vector<32x32xf32>
    %32 = arith.addf %29, %31 : vector<32x32xf32>
    %33 = vector.extract_strided_slice %22 {offsets = [128, 0], sizes = [32, 32], strides = [1, 1]} : vector<192x32xf32> to vector<32x32xf32>
    %cst_25 = arith.constant dense<0.000000e+00> : vector<32x32xf32>
    %34 = tpu.matmul %33, %7, %cst_25 {dimension_numbers = #tpu.dot_dimension_numbers<[1], [0], [0], [1], [0, 0, 1, 1], [], []>} : vector<32x32xf32>, vector<32x32xf32>, vector<32x32xf32> -> vector<32x32xf32>
    %35 = arith.addf %32, %34 : vector<32x32xf32>
    %36 = vector.broadcast %8 : vector<32x1xf32> to vector<32x32xf32>
    %37 = arith.addf %35, %36 : vector<32x32xf32>
    %38 = vector.extract_strided_slice %22 {offsets = [160, 0], sizes = [32, 32], strides = [1, 1]} : vector<192x32xf32> to vector<32x32xf32>
    %39 = vector.broadcast %15 : vector<32x1xf32> to vector<32x32xf32>
    %40 = arith.addf %38, %39 : vector<32x32xf32>
    %c352 = arith.constant 352 : index
    %c0_26 = arith.constant 0 : index
    %41 = vector.load %arg3[%c352, %c0_26] : memref<880x32xf32, #tpu.memory_space<vmem>>, vector<32x32xf32>
    %c0_27 = arith.constant 0 : index
    %c0_28 = arith.constant 0 : index
    %42 = vector.load %arg2[%c0_27, %c0_28] : memref<32x2xf32, #tpu.memory_space<vmem>>, vector<32x2xf32>
    %cst_29 = arith.constant 2.000000e+01 : f32
    %43 = vector.broadcast %cst_29 : f32 to vector<32x2xf32>
    %44 = arith.minimumf %42, %43 : vector<32x2xf32>
    %45 = math.exp %44 : vector<32x2xf32>
    %46 = arith.mulf %45, %45 : vector<32x2xf32>
    %cst_30 = arith.constant 2.000000e+00 : f32
    %47 = vector.broadcast %cst_30 : f32 to vector<32x2xf32>
    %48 = arith.mulf %47, %45 : vector<32x2xf32>
    %49 = arith.addf %46, %48 : vector<32x2xf32>
    %cst_31 = arith.constant 2.000000e+01 : f32
    %50 = vector.broadcast %cst_31 : f32 to vector<32x2xf32>
    %51 = arith.cmpf ogt, %42, %50 : vector<32x2xf32>
    %52 = arith.mulf %42, %49 : vector<32x2xf32>
    %cst_32 = arith.constant 2.000000e+00 : f32
    %53 = vector.broadcast %cst_32 : f32 to vector<32x2xf32>
    %54 = arith.addf %49, %53 : vector<32x2xf32>
    %55 = arith.divf %52, %54 : vector<32x2xf32>
    %56 = arith.select %51, %42, %55 : vector<32x2xi1>, vector<32x2xf32>
    %cst_33 = arith.constant dense<0.000000e+00> : vector<32x2xf32>
    %57 = tpu.matmul %41, %56, %cst_33 {dimension_numbers = #tpu.dot_dimension_numbers<[1], [0], [0], [1], [0, 0, 1, 1], [], []>} : vector<32x32xf32>, vector<32x2xf32>, vector<32x2xf32> -> vector<32x2xf32>
    %58 = vector.broadcast %14 : vector<32x1xf32> to vector<32x2xf32>
    %59 = arith.addf %57, %58 : vector<32x2xf32>
    %cst_34 = arith.constant dense<0.000000e+00> : vector<8x32xf32>
    %60 = tpu.matmul %2, %37, %cst_34 {dimension_numbers = #tpu.dot_dimension_numbers<[1], [0], [0], [1], [0, 0, 1, 1], [], []>} : vector<8x32xf32>, vector<32x32xf32>, vector<8x32xf32> -> vector<8x32xf32>
    %61 = arith.mulf %37, %37 : vector<32x32xf32>
    %cst_35 = arith.constant dense<0.000000e+00> : vector<8x32xf32>
    %62 = tpu.matmul %2, %61, %cst_35 {dimension_numbers = #tpu.dot_dimension_numbers<[1], [0], [0], [1], [0, 0, 1, 1], [], []>} : vector<8x32xf32>, vector<32x32xf32>, vector<8x32xf32> -> vector<8x32xf32>
    %63 = tpu.concatenate %60, %62 in 0 : vector<8x32xf32>, vector<8x32xf32> -> vector<16x32xf32>
    %cst_36 = arith.constant dense<0.000000e+00> : vector<16x2xf32>
    %64 = tpu.matmul %63, %1, %cst_36 {dimension_numbers = #tpu.dot_dimension_numbers<[1], [0], [0], [1], [0, 0, 1, 1], [], []>} : vector<16x32xf32>, vector<32x2xf32>, vector<16x2xf32> -> vector<16x2xf32>
    %cst_37 = arith.constant 1.562500e-02 : f32
    %65 = vector.broadcast %cst_37 : f32 to vector<16x2xf32>
    %66 = arith.mulf %64, %65 : vector<16x2xf32>
    %67 = vector.extract_strided_slice %66 {offsets = [0, 0], sizes = [8, 2], strides = [1, 1]} : vector<16x2xf32> to vector<8x2xf32>
    %68 = vector.extract_strided_slice %66 {offsets = [8, 0], sizes = [8, 2], strides = [1, 1]} : vector<16x2xf32> to vector<8x2xf32>
    %69 = arith.mulf %67, %67 : vector<8x2xf32>
    %70 = arith.subf %68, %69 : vector<8x2xf32>
    %cst_38 = arith.constant 9.99999974E-6 : f32
    %71 = vector.broadcast %cst_38 : f32 to vector<8x2xf32>
    %72 = arith.addf %70, %71 : vector<8x2xf32>
    %73 = math.rsqrt %72 : vector<8x2xf32>
    %74 = arith.mulf %67, %73 : vector<8x2xf32>
    %75 = tpu.concatenate %73, %74 in 0 : vector<8x2xf32>, vector<8x2xf32> -> vector<16x2xf32>
    %cst_39 = arith.constant dense<0.000000e+00> : vector<64x2xf32>
    %76 = tpu.matmul %3, %75, %cst_39 {dimension_numbers = #tpu.dot_dimension_numbers<[1], [0], [0], [1], [0, 0, 1, 1], [], []>} : vector<64x16xf32>, vector<16x2xf32>, vector<64x2xf32> -> vector<64x2xf32>
    %77 = vector.extract_strided_slice %76 {offsets = [0, 0], sizes = [32, 2], strides = [1, 1]} : vector<64x2xf32> to vector<32x2xf32>
    %78 = vector.broadcast %9 : vector<32x1xf32> to vector<32x2xf32>
    %79 = arith.mulf %77, %78 : vector<32x2xf32>
    %80 = vector.extract_strided_slice %76 {offsets = [32, 0], sizes = [32, 2], strides = [1, 1]} : vector<64x2xf32> to vector<32x2xf32>
    %81 = vector.broadcast %9 : vector<32x1xf32> to vector<32x2xf32>
    %82 = arith.mulf %80, %81 : vector<32x2xf32>
    %83 = vector.broadcast %10 : vector<32x1xf32> to vector<32x2xf32>
    %84 = arith.subf %83, %82 : vector<32x2xf32>
    %85 = tpu.concatenate %79, %84, %59 in 0 : vector<32x2xf32>, vector<32x2xf32>, vector<32x2xf32> -> vector<96x2xf32>
    %cst_40 = arith.constant dense<0.000000e+00> : vector<96x32xf32>
    %86 = tpu.matmul %85, %0, %cst_40 {dimension_numbers = #tpu.dot_dimension_numbers<[1], [0], [0], [1], [0, 0, 1, 1], [], []>} : vector<96x2xf32>, vector<2x32xf32>, vector<96x32xf32> -> vector<96x32xf32>
    %87 = vector.extract_strided_slice %86 {offsets = [0, 0], sizes = [32, 32], strides = [1, 1]} : vector<96x32xf32> to vector<32x32xf32>
    %88 = arith.mulf %37, %87 : vector<32x32xf32>
    %89 = vector.extract_strided_slice %86 {offsets = [32, 0], sizes = [32, 32], strides = [1, 1]} : vector<96x32xf32> to vector<32x32xf32>
    %90 = arith.addf %88, %89 : vector<32x32xf32>
    %cst_41 = arith.constant 2.000000e+01 : f32
    %91 = vector.broadcast %cst_41 : f32 to vector<32x32xf32>
    %92 = arith.minimumf %90, %91 : vector<32x32xf32>
    %93 = math.exp %92 : vector<32x32xf32>
    %94 = arith.mulf %93, %93 : vector<32x32xf32>
    %cst_42 = arith.constant 2.000000e+00 : f32
    %95 = vector.broadcast %cst_42 : f32 to vector<32x32xf32>
    %96 = arith.mulf %95, %93 : vector<32x32xf32>
    %97 = arith.addf %94, %96 : vector<32x32xf32>
    %cst_43 = arith.constant 2.000000e+01 : f32
    %98 = vector.broadcast %cst_43 : f32 to vector<32x32xf32>
    %99 = arith.cmpf ogt, %90, %98 : vector<32x32xf32>
    %100 = arith.mulf %90, %97 : vector<32x32xf32>
    %cst_44 = arith.constant 2.000000e+00 : f32
    %101 = vector.broadcast %cst_44 : f32 to vector<32x32xf32>
    %102 = arith.addf %97, %101 : vector<32x32xf32>
    %103 = arith.divf %100, %102 : vector<32x32xf32>
    %104 = arith.select %99, %90, %103 : vector<32x32xi1>, vector<32x32xf32>
    %105 = vector.extract_strided_slice %86 {offsets = [64, 0], sizes = [32, 32], strides = [1, 1]} : vector<96x32xf32> to vector<32x32xf32>
    %106 = arith.addf %104, %105 : vector<32x32xf32>
    %c192 = arith.constant 192 : index
    %c0_45 = arith.constant 0 : index
    %107 = vector.load %arg3[%c192, %c0_45] : memref<880x32xf32, #tpu.memory_space<vmem>>, vector<160x32xf32>
    %cst_46 = arith.constant dense<0.000000e+00> : vector<160x32xf32>
    %108 = tpu.matmul %107, %106, %cst_46 {dimension_numbers = #tpu.dot_dimension_numbers<[1], [0], [0], [1], [0, 0, 1, 1], [], []>} : vector<160x32xf32>, vector<32x32xf32>, vector<160x32xf32> -> vector<160x32xf32>
    %109 = vector.extract_strided_slice %108 {offsets = [64, 0], sizes = [32, 32], strides = [1, 1]} : vector<160x32xf32> to vector<32x32xf32>
    %110 = vector.extract_strided_slice %108 {offsets = [0, 0], sizes = [32, 32], strides = [1, 1]} : vector<160x32xf32> to vector<32x32xf32>
    %cst_47 = arith.constant dense<0.000000e+00> : vector<32x32xf32>
    %111 = tpu.matmul %110, %4, %cst_47 {dimension_numbers = #tpu.dot_dimension_numbers<[1], [0], [0], [1], [0, 0, 1, 1], [], []>} : vector<32x32xf32>, vector<32x32xf32>, vector<32x32xf32> -> vector<32x32xf32>
    %112 = arith.addf %109, %111 : vector<32x32xf32>
    %113 = vector.extract_strided_slice %108 {offsets = [32, 0], sizes = [32, 32], strides = [1, 1]} : vector<160x32xf32> to vector<32x32xf32>
    %cst_48 = arith.constant dense<0.000000e+00> : vector<32x32xf32>
    %114 = tpu.matmul %113, %5, %cst_48 {dimension_numbers = #tpu.dot_dimension_numbers<[1], [0], [0], [1], [0, 0, 1, 1], [], []>} : vector<32x32xf32>, vector<32x32xf32>, vector<32x32xf32> -> vector<32x32xf32>
    %115 = arith.addf %112, %114 : vector<32x32xf32>
    %116 = vector.extract_strided_slice %108 {offsets = [96, 0], sizes = [32, 32], strides = [1, 1]} : vector<160x32xf32> to vector<32x32xf32>
    %cst_49 = arith.constant dense<0.000000e+00> : vector<32x32xf32>
    %117 = tpu.matmul %116, %6, %cst_49 {dimension_numbers = #tpu.dot_dimension_numbers<[1], [0], [0], [1], [0, 0, 1, 1], [], []>} : vector<32x32xf32>, vector<32x32xf32>, vector<32x32xf32> -> vector<32x32xf32>
    %118 = arith.addf %115, %117 : vector<32x32xf32>
    %119 = vector.extract_strided_slice %108 {offsets = [128, 0], sizes = [32, 32], strides = [1, 1]} : vector<160x32xf32> to vector<32x32xf32>
    %cst_50 = arith.constant dense<0.000000e+00> : vector<32x32xf32>
    %120 = tpu.matmul %119, %7, %cst_50 {dimension_numbers = #tpu.dot_dimension_numbers<[1], [0], [0], [1], [0, 0, 1, 1], [], []>} : vector<32x32xf32>, vector<32x32xf32>, vector<32x32xf32> -> vector<32x32xf32>
    %121 = arith.addf %118, %120 : vector<32x32xf32>
    %122 = vector.broadcast %11 : vector<32x1xf32> to vector<32x32xf32>
    %123 = arith.addf %121, %122 : vector<32x32xf32>
    %cst_51 = arith.constant dense<0.000000e+00> : vector<8x32xf32>
    %124 = tpu.matmul %2, %123, %cst_51 {dimension_numbers = #tpu.dot_dimension_numbers<[1], [0], [0], [1], [0, 0, 1, 1], [], []>} : vector<8x32xf32>, vector<32x32xf32>, vector<8x32xf32> -> vector<8x32xf32>
    %125 = arith.mulf %123, %123 : vector<32x32xf32>
    %cst_52 = arith.constant dense<0.000000e+00> : vector<8x32xf32>
    %126 = tpu.matmul %2, %125, %cst_52 {dimension_numbers = #tpu.dot_dimension_numbers<[1], [0], [0], [1], [0, 0, 1, 1], [], []>} : vector<8x32xf32>, vector<32x32xf32>, vector<8x32xf32> -> vector<8x32xf32>
    %127 = tpu.concatenate %124, %126 in 0 : vector<8x32xf32>, vector<8x32xf32> -> vector<16x32xf32>
    %cst_53 = arith.constant dense<0.000000e+00> : vector<16x2xf32>
    %128 = tpu.matmul %127, %1, %cst_53 {dimension_numbers = #tpu.dot_dimension_numbers<[1], [0], [0], [1], [0, 0, 1, 1], [], []>} : vector<16x32xf32>, vector<32x2xf32>, vector<16x2xf32> -> vector<16x2xf32>
    %cst_54 = arith.constant 1.562500e-02 : f32
    %129 = vector.broadcast %cst_54 : f32 to vector<16x2xf32>
    %130 = arith.mulf %128, %129 : vector<16x2xf32>
    %131 = vector.extract_strided_slice %130 {offsets = [0, 0], sizes = [8, 2], strides = [1, 1]} : vector<16x2xf32> to vector<8x2xf32>
    %132 = vector.extract_strided_slice %130 {offsets = [8, 0], sizes = [8, 2], strides = [1, 1]} : vector<16x2xf32> to vector<8x2xf32>
    %133 = arith.mulf %131, %131 : vector<8x2xf32>
    %134 = arith.subf %132, %133 : vector<8x2xf32>
    %cst_55 = arith.constant 9.99999974E-6 : f32
    %135 = vector.broadcast %cst_55 : f32 to vector<8x2xf32>
    %136 = arith.addf %134, %135 : vector<8x2xf32>
    %137 = math.rsqrt %136 : vector<8x2xf32>
    %138 = arith.mulf %131, %137 : vector<8x2xf32>
    %139 = tpu.concatenate %137, %138 in 0 : vector<8x2xf32>, vector<8x2xf32> -> vector<16x2xf32>
    %cst_56 = arith.constant dense<0.000000e+00> : vector<64x2xf32>
    %140 = tpu.matmul %3, %139, %cst_56 {dimension_numbers = #tpu.dot_dimension_numbers<[1], [0], [0], [1], [0, 0, 1, 1], [], []>} : vector<64x16xf32>, vector<16x2xf32>, vector<64x2xf32> -> vector<64x2xf32>
    %141 = vector.extract_strided_slice %140 {offsets = [0, 0], sizes = [32, 2], strides = [1, 1]} : vector<64x2xf32> to vector<32x2xf32>
    %142 = vector.broadcast %12 : vector<32x1xf32> to vector<32x2xf32>
    %143 = arith.mulf %141, %142 : vector<32x2xf32>
    %144 = vector.extract_strided_slice %140 {offsets = [32, 0], sizes = [32, 2], strides = [1, 1]} : vector<64x2xf32> to vector<32x2xf32>
    %145 = vector.broadcast %12 : vector<32x1xf32> to vector<32x2xf32>
    %146 = arith.mulf %144, %145 : vector<32x2xf32>
    %147 = vector.broadcast %13 : vector<32x1xf32> to vector<32x2xf32>
    %148 = arith.subf %147, %146 : vector<32x2xf32>
    %149 = tpu.concatenate %143, %148 in 0 : vector<32x2xf32>, vector<32x2xf32> -> vector<64x2xf32>
    %cst_57 = arith.constant dense<0.000000e+00> : vector<64x32xf32>
    %150 = tpu.matmul %149, %0, %cst_57 {dimension_numbers = #tpu.dot_dimension_numbers<[1], [0], [0], [1], [0, 0, 1, 1], [], []>} : vector<64x2xf32>, vector<2x32xf32>, vector<64x32xf32> -> vector<64x32xf32>
    %151 = vector.extract_strided_slice %150 {offsets = [0, 0], sizes = [32, 32], strides = [1, 1]} : vector<64x32xf32> to vector<32x32xf32>
    %152 = arith.mulf %123, %151 : vector<32x32xf32>
    %153 = vector.extract_strided_slice %150 {offsets = [32, 0], sizes = [32, 32], strides = [1, 1]} : vector<64x32xf32> to vector<32x32xf32>
    %154 = arith.addf %152, %153 : vector<32x32xf32>
    %cst_58 = arith.constant 2.000000e+01 : f32
    %155 = vector.broadcast %cst_58 : f32 to vector<32x32xf32>
    %156 = arith.minimumf %154, %155 : vector<32x32xf32>
    %157 = math.exp %156 : vector<32x32xf32>
    %158 = arith.mulf %157, %157 : vector<32x32xf32>
    %cst_59 = arith.constant 2.000000e+00 : f32
    %159 = vector.broadcast %cst_59 : f32 to vector<32x32xf32>
    %160 = arith.mulf %159, %157 : vector<32x32xf32>
    %161 = arith.addf %158, %160 : vector<32x32xf32>
    %cst_60 = arith.constant 2.000000e+01 : f32
    %162 = vector.broadcast %cst_60 : f32 to vector<32x32xf32>
    %163 = arith.cmpf ogt, %154, %162 : vector<32x32xf32>
    %164 = arith.mulf %154, %161 : vector<32x32xf32>
    %cst_61 = arith.constant 2.000000e+00 : f32
    %165 = vector.broadcast %cst_61 : f32 to vector<32x32xf32>
    %166 = arith.addf %161, %165 : vector<32x32xf32>
    %167 = arith.divf %164, %166 : vector<32x32xf32>
    %168 = arith.select %163, %154, %167 : vector<32x32xi1>, vector<32x32xf32>
    %169 = arith.addf %168, %40 : vector<32x32xf32>
    %170 = vector.extract_strided_slice %169 {offsets = [0, 0], sizes = [32, 16], strides = [1, 1]} : vector<32x32xf32> to vector<32x16xf32>
    %c0_62 = arith.constant 0 : index
    %c0_63 = arith.constant 0 : index
    %c0_64 = arith.constant 0 : index
    %171 = vector.load %arg4[%c0_62, %c0_63, %c0_64] : memref<2x32x16xf32, #tpu.memory_space<vmem>>, vector<1x32x16xf32>
    %172 = vector.shape_cast %171 : vector<1x32x16xf32> to vector<32x16xf32>
    %173 = vector.shape_cast %170 : vector<32x16xf32> to vector<1x32x16xf32>
    tpu.vector_store %arg4[%c0_62, %c0_63, %c0_64], %173 {strides = array<i32>} : memref<2x32x16xf32, #tpu.memory_space<vmem>>, vector<1x32x16xf32>,
    %174 = vector.extract_strided_slice %169 {offsets = [0, 16], sizes = [32, 16], strides = [1, 1]} : vector<32x32xf32> to vector<32x16xf32>
    %c1_65 = arith.constant 1 : index
    %c0_66 = arith.constant 0 : index
    %c0_67 = arith.constant 0 : index
    %175 = vector.load %arg4[%c1_65, %c0_66, %c0_67] : memref<2x32x16xf32, #tpu.memory_space<vmem>>, vector<1x32x16xf32>
    %176 = vector.shape_cast %175 : vector<1x32x16xf32> to vector<32x16xf32>
    %177 = vector.shape_cast %174 : vector<32x16xf32> to vector<1x32x16xf32>
    tpu.vector_store %arg4[%c1_65, %c0_66, %c0_67], %177 {strides = array<i32>} : memref<2x32x16xf32, #tpu.memory_space<vmem>>, vector<1x32x16xf32>,
    return
  }
  func.func @transform_0(%arg0: i32) -> (i32, i32, i32) {
    %c0_i32 = arith.constant 0 : i32
    %c0_i32_0 = arith.constant 0 : i32
    %c0_i32_1 = arith.constant 0 : i32
    %c0_i32_2 = arith.constant 0 : i32
    return %c0_i32, %c0_i32_0, %c0_i32_1 : i32, i32, i32
  }
  func.func @transform_1(%arg0: i32) -> (i32, i32) {
    %c0_i32 = arith.constant 0 : i32
    %c0_i32_0 = arith.constant 0 : i32
    %c0_i32_1 = arith.constant 0 : i32
    return %c0_i32, %c0_i32_0 : i32, i32
  }
  func.func @transform_2(%arg0: i32) -> (i32, i32) {
    %c0_i32 = arith.constant 0 : i32
    %c0_i32_0 = arith.constant 0 : i32
    %c0_i32_1 = arith.constant 0 : i32
    return %c0_i32, %c0_i32_0 : i32, i32
  }
  func.func @transform_3(%arg0: i32) -> (i32, i32, i32) {
    %c0_i32 = arith.constant 0 : i32
    %c0_i32_0 = arith.constant 0 : i32
    %c0_i32_1 = arith.constant 0 : i32
    %c0_i32_2 = arith.constant 0 : i32
    return %c0_i32, %c0_i32_0, %c0_i32_1 : i32, i32, i32
  }
}

</mosaic_0001>

<llo_original>
// kernel: residual_temporal_block.1
$region0: #{residual_temporal_block.1}
  #allocation0 [shape = 'u32[]', space=smem, size = 0x4, offset = 0x4, fixed_abs, tag = 'smem constant byte address 0x4 - core index']
  #allocation1 [shape = 'u32[72,128]{1,0:T(1,128)}', space=vmem, size = 0x9000, scoped, tag = 'internal scratch']
  %s0 = inlined_call_operand.vmem [shape: f32[2,16,16], index: 0, kind: input, shape index: {}]
  %s1 = inlined_call_operand.vmem [shape: f32[32,2], index: 1, kind: input, shape index: {}]
  %s2 = inlined_call_operand.vmem [shape: f32[880,32], index: 2, kind: input, shape index: {}]
  %s3 = inlined_call_operand.vmem [shape: f32[2,32,16], index: 3, kind: output, shape index: {}]
  %s4 = sld [smem:[#allocation0]]
  $region22: #{residual_temporal_block.1} parent=0
    _
  %s6 = ssub.s32 1, %s4
  %s7 = scalar_select 0, %s6, %s4
  // Predicated region
  $region2: #{residual_temporal_block.1} parent=0 // pred_check
    _
  $region3: #{residual_temporal_block.1} parent=0 // pred_check_branch
    %9 = sbr.rel (0) target = $region5
  $region4: #{residual_temporal_block.1} parent=0 // pred_region
    _
  $region5: #{residual_temporal_block.1} parent=0 // pred_fallthru
    _
  // Predicated region
  $region6: #{residual_temporal_block.1} parent=0 // pred_check
    _
  $region7: #{residual_temporal_block.1} parent=0 // pred_check_branch
    %11 = sbr.rel (0) target = $region9
  $region8: #{residual_temporal_block.1} parent=0 // pred_region
    _
  $region9: #{residual_temporal_block.1} parent=0 // pred_fallthru
    _
  // Predicated region
  $region10: #{residual_temporal_block.1} parent=0 // pred_check
    _
  $region11: #{residual_temporal_block.1} parent=0 // pred_check_branch
    %13 = sbr.rel (0) target = $region13
  $region12: #{residual_temporal_block.1} parent=0 // pred_region
    _
  $region13: #{residual_temporal_block.1} parent=0 // pred_fallthru
    _
  %v14 = vld [vmem:[%s2 + $0x248] sm:$0x3]
  %v15 = vld [vmem:[%s2 + $0x250] sm:$0xff]
  %v16 = vld [vmem:[%s2 + $0x258] sm:$0xff]
  %v17 = vld [vmem:[%s2 + $0x260] sm:$0xff]
  %v18 = vld [vmem:[%s2 + $0x268] sm:$0xff]
  %v19 = vld [vmem:[%s2 + $0x200] sm:$0xff]
  %v20 = vld [vmem:[%s2 + $0x208] sm:$0xff]
  %v21 = vld [vmem:[%s2 + $0x210] sm:$0xff]
  %v22 = vld [vmem:[%s2 + $0x218] sm:$0xff]
  %v23 = vld [vmem:[%s2 + $0x220] sm:$0xff]
  %v24 = vld [vmem:[%s2 + $0x228] sm:$0xff]
  %v25 = vld [vmem:[%s2 + $0x230] sm:$0xff]
  %v26 = vld [vmem:[%s2 + $0x238] sm:$0xff]
  %v27 = vld [vmem:[%s2 + $0x240] sm:$0xff]
  %v28 = vld [vmem:[%s2 + $0x180] sm:$0xff]
  %v29 = vld [vmem:[%s2 + $0x188] sm:$0xff]
  %v30 = vld [vmem:[%s2 + $0x190] sm:$0xff]
  %v31 = vld [vmem:[%s2 + $0x198] sm:$0xff]
  %v32 = vld [vmem:[%s2 + $0x1a0] sm:$0xff]
  %v33 = vld [vmem:[%s2 + $0x1a8] sm:$0xff]
  %v34 = vld [vmem:[%s2 + $0x1b0] sm:$0xff]
  %v35 = vld [vmem:[%s2 + $0x1b8] sm:$0xff]
  %v36 = vld [vmem:[%s2 + $0x1c0] sm:$0xff]
  %v37 = vld [vmem:[%s2 + $0x1c8] sm:$0xff]
  %v38 = vld [vmem:[%s2 + $0x1d0] sm:$0xff]
  %v39 = vld [vmem:[%s2 + $0x1d8] sm:$0xff]
  %v40 = vld [vmem:[%s2 + $0x1e0] sm:$0xff]
  %v41 = vld [vmem:[%s2 + $0x1e8] sm:$0xff]
  %v42 = vld [vmem:[%s2 + $0x1f0] sm:$0xff]
  %v43 = vld [vmem:[%s2 + $0x1f8] sm:$0xff]
  %v44 = vld [vmem:[%s2 + $0x270] sm:$0xff]
  %v45 = vld [vmem:[%s2 + $0x278] sm:$0xff]
  %v46 = vld [vmem:[%s2 + $0x280] sm:$0xff]
  %v47 = vld [vmem:[%s2 + $0x288] sm:$0xff]
  %v48 = vld [vmem:[%s2 + $0x290] sm:$0xff]
  %v49 = vld [vmem:[%s2 + $0x298] sm:$0xff]
  %v50 = vld [vmem:[%s2 + $0x2a0] sm:$0xff]
  %v51 = vld [vmem:[%s2 + $0x2a8] sm:$0xff]
  %v52 = vld [vmem:[%s2 + $0x2b0] sm:$0xff]
  %v53 = vld [vmem:[%s2 + $0x2b8] sm:$0xff]
  %v54 = vld [vmem:[%s2 + $0x2c0] sm:$0xff]
  %v55 = vld [vmem:[%s2 + $0x2c8] sm:$0xff]
  %v56 = vld [vmem:[%s2 + $0x2d0] sm:$0xff]
  %v57 = vld [vmem:[%s2 + $0x2d8] sm:$0xff]
  %v58 = vld [vmem:[%s2 + $0x2e0] sm:$0xff]
  %v59 = vld [vmem:[%s2 + $0x2e8] sm:$0xff]
  %v60 = vld [vmem:[%s2 + $0x2f0] sm:$0xff]
  %v61 = vld [vmem:[%s2 + $0x2f8] sm:$0xff]
  %v62 = vld [vmem:[%s2 + $0x300] sm:$0xff]
  %v63 = vld [vmem:[%s2 + $0x308] sm:$0xff]
  %v64 = vld [vmem:[%s2 + $0x310] sm:$0xff]
  %v65 = vld [vmem:[%s2 + $0x318] sm:$0xff]
  %v66 = vld [vmem:[%s2 + $0x320] sm:$0xff]
  %v67 = vld [vmem:[%s2 + $0x328] sm:$0xff]
  %v68 = vld [vmem:[%s2 + $0x330] sm:$0xff]
  %v69 = vld [vmem:[%s2 + $0x338] sm:$0xff]
  %v70 = vld [vmem:[%s2 + $0x340] sm:$0xff]
  %v71 = vld [vmem:[%s2 + $0x348] sm:$0xff]
  %v72 = vld [vmem:[%s2 + $0x350] sm:$0xff]
  %v73 = vld [vmem:[%s2 + $0x358] sm:$0xff]
  %v74 = vld [vmem:[%s2 + $0x360] sm:$0xff]
  %v75 = vld [vmem:[%s2 + $0x368] sm:$0xff]
  %v76 = vld [vmem:[%s0] sm:$0xff]
  %v77 = vld [vmem:[%s0 + $0x8] sm:$0xff]
  %s78 = scalar_lea.vmem %s0, 16
  %v79 = vld [vmem:[%s78] sm:$0xff]
  %v80 = vld [vmem:[%s78 + $0x8] sm:$0xff]
  %83 = vrot.lane.b32.xlu0 %v79, 16
  %v84 = vpop.permute.xlu0 %83
  %85 = vrot.lane.b32.xlu0 %v80, 16
  %v86 = vpop.permute.xlu0 %85
  %vm89 = vcmask 130048
  %v90 = vsel %vm89, %v76, %v84
  %v91 = vsel %vm89, %v77, %v86
  %v92 = vld [vmem:[%s2] sm:$0xff]
  %v93 = vld [vmem:[%s2 + $0x8] sm:$0xff]
  %v94 = vld [vmem:[%s2 + $0x10] sm:$0xff]
  %v95 = vld [vmem:[%s2 + $0x18] sm:$0xff]
  %v96 = vld [vmem:[%s2 + $0x20] sm:$0xff]
  %v97 = vld [vmem:[%s2 + $0x28] sm:$0xff]
  %v98 = vld [vmem:[%s2 + $0x30] sm:$0xff]
  %v99 = vld [vmem:[%s2 + $0x38] sm:$0xff]
  %v100 = vld [vmem:[%s2 + $0x40] sm:$0xff]
  %v101 = vld [vmem:[%s2 + $0x48] sm:$0xff]
  %v102 = vld [vmem:[%s2 + $0x50] sm:$0xff]
  %v103 = vld [vmem:[%s2 + $0x58] sm:$0xff]
  %v104 = vld [vmem:[%s2 + $0x60] sm:$0xff]
  %v105 = vld [vmem:[%s2 + $0x68] sm:$0xff]
  %v106 = vld [vmem:[%s2 + $0x70] sm:$0xff]
  %v107 = vld [vmem:[%s2 + $0x78] sm:$0xff]
  %v108 = vld [vmem:[%s2 + $0x80] sm:$0xff]
  %v109 = vld [vmem:[%s2 + $0x88] sm:$0xff]
  %v110 = vld [vmem:[%s2 + $0x90] sm:$0xff]
  %v111 = vld [vmem:[%s2 + $0x98] sm:$0xff]
  %v112 = vld [vmem:[%s2 + $0xa0] sm:$0xff]
  %v113 = vld [vmem:[%s2 + $0xa8] sm:$0xff]
  %v114 = vld [vmem:[%s2 + $0xb0] sm:$0xff]
  %v115 = vld [vmem:[%s2 + $0xb8] sm:$0xff]
  %v117 = vsel %vm89, %v92, 0
  %v120 = vsel %vm89, %v93, 0
  %v123 = vsel %vm89, %v94, 0
  %v126 = vsel %vm89, %v95, 0
  %v129 = vsel %vm89, %v96, 0
  %v132 = vsel %vm89, %v97, 0
  %v135 = vsel %vm89, %v98, 0
  %v138 = vsel %vm89, %v99, 0
  %v141 = vsel %vm89, %v100, 0
  %v144 = vsel %vm89, %v101, 0
  %v147 = vsel %vm89, %v102, 0
  %v150 = vsel %vm89, %v103, 0
  %v153 = vsel %vm89, %v104, 0
  %v156 = vsel %vm89, %v105, 0
  %v159 = vsel %vm89, %v106, 0
  %v162 = vsel %vm89, %v107, 0
  %v165 = vsel %vm89, %v108, 0
  %v168 = vsel %vm89, %v109, 0
  %v171 = vsel %vm89, %v110, 0
  %v174 = vsel %vm89, %v111, 0
  %v177 = vsel %vm89, %v112, 0
  %v180 = vsel %vm89, %v113, 0
  %v183 = vsel %vm89, %v114, 0
  %v186 = vsel %vm89, %v115, 0
  %188 = vmatpush.msra.mxu0 0.0
  %189 = vmatpush.msra.mxu0 0.0
  %190 = vmatpush.msra.mxu0 0.0
  %191 = vmatpush.msra.mxu0 0.0
  %192 = vmatpush.msra.mxu0 0.0
  %193 = vmatpush.msra.mxu0 0.0
  %194 = vmatpush.msra.mxu0 0.0
  %195 = vmatpush.msra.mxu0 0.0
  %196 = vmatpush.msra.mxu0 0.0
  %197 = vmatpush.msra.mxu0 0.0
  %198 = vmatpush.msra.mxu0 0.0
  %199 = vmatpush.msra.mxu0 0.0
  %200 = vmatpush.msra.mxu0 0.0
  %201 = vmatpush.msra.mxu0 0.0
  %202 = vmatpush.msra.mxu0 %v91
  %203 = vmatpush.msra.mxu0 %v90
  %204 = vmatmul.f32.gmra.mxu0 %v117
  %v205 = vpop.f32.mrf.mxu0
  %v206 = vadd.f32 0.0, %v205
  %207 = vmatmul.f32.gmra.mxu0 %v120
  %v208 = vpop.f32.mrf.mxu0
  %v209 = vadd.f32 0.0, %v208
  %210 = vmatmul.f32.gmra.mxu0 %v123
  %v211 = vpop.f32.mrf.mxu0
  %v212 = vadd.f32 0.0, %v211
  %213 = vmatmul.f32.gmra.mxu0 %v126
  %v214 = vpop.f32.mrf.mxu0
  %v215 = vadd.f32 0.0, %v214
  %216 = vmatmul.f32.gmra.mxu0 %v129
  %v217 = vpop.f32.mrf.mxu0
  %v218 = vadd.f32 0.0, %v217
  %219 = vmatmul.f32.gmra.mxu0 %v132
  %v220 = vpop.f32.mrf.mxu0
  %v221 = vadd.f32 0.0, %v220
  %222 = vmatmul.f32.gmra.mxu0 %v135
  %v223 = vpop.f32.mrf.mxu0
  %v224 = vadd.f32 0.0, %v223
  %225 = vmatmul.f32.gmra.mxu0 %v138
  %v226 = vpop.f32.mrf.mxu0
  %v227 = vadd.f32 0.0, %v226
  %228 = vmatmul.f32.gmra.mxu0 %v141
  %v229 = vpop.f32.mrf.mxu0
  %v230 = vadd.f32 0.0, %v229
  %231 = vmatmul.f32.gmra.mxu0 %v144
  %v232 = vpop.f32.mrf.mxu0
  %v233 = vadd.f32 0.0, %v232
  %234 = vmatmul.f32.gmra.mxu0 %v147
  %v235 = vpop.f32.mrf.mxu0
  %v236 = vadd.f32 0.0, %v235
  %237 = vmatmul.f32.gmra.mxu0 %v150
  %v238 = vpop.f32.mrf.mxu0
  %v239 = vadd.f32 0.0, %v238
  %240 = vmatmul.f32.gmra.mxu0 %v153
  %v241 = vpop.f32.mrf.mxu0
  %v242 = vadd.f32 0.0, %v241
  %243 = vmatmul.f32.gmra.mxu0 %v156
  %v244 = vpop.f32.mrf.mxu0
  %v245 = vadd.f32 0.0, %v244
  %246 = vmatmul.f32.gmra.mxu0 %v159
  %v247 = vpop.f32.mrf.mxu0
  %v248 = vadd.f32 0.0, %v247
  %249 = vmatmul.f32.gmra.mxu0 %v162
  %v250 = vpop.f32.mrf.mxu0
  %v251 = vadd.f32 0.0, %v250
  %252 = vmatmul.f32.gmra.mxu0 %v165
  %v253 = vpop.f32.mrf.mxu0
  %v254 = vadd.f32 0.0, %v253
  %255 = vmatmul.f32.gmra.mxu0 %v168
  %v256 = vpop.f32.mrf.mxu0
  %v257 = vadd.f32 0.0, %v256
  %258 = vmatmul.f32.gmra.mxu0 %v171
  %v259 = vpop.f32.mrf.mxu0
  %v260 = vadd.f32 0.0, %v259
  %261 = vmatmul.f32.gmra.mxu0 %v174
  %v262 = vpop.f32.mrf.mxu0
  %v263 = vadd.f32 0.0, %v262
  %264 = vmatmul.f32.gmra.mxu0 %v177
  %v265 = vpop.f32.mrf.mxu0
  %v266 = vadd.f32 0.0, %v265
  %267 = vmatmul.f32.gmra.mxu0 %v180
  %v268 = vpop.f32.mrf.mxu0
  %v269 = vadd.f32 0.0, %v268
  %270 = vmatmul.f32.gmra.mxu0 %v183
  %v271 = vpop.f32.mrf.mxu0
  %v272 = vadd.f32 0.0, %v271
  %273 = vmatmul.f32.gmra.mxu0 %v186
  %v274 = vpop.f32.mrf.mxu0
  %v275 = vadd.f32 0.0, %v274
  %276 = vdwg.mxu0
  %vm277 = vcmask 261120
  %v279 = vsel %vm277, %v206, 0
  %v282 = vsel %vm277, %v209, 0
  %v285 = vsel %vm277, %v212, 0
  %v288 = vsel %vm277, %v215, 0
  %290 = vmatpush.msra.mxu0 0.0
  %291 = vmatpush.msra.mxu0 0.0
  %292 = vmatpush.msra.mxu0 0.0
  %293 = vmatpush.msra.mxu0 0.0
  %294 = vmatpush.msra.mxu0 0.0
  %295 = vmatpush.msra.mxu0 0.0
  %296 = vmatpush.msra.mxu0 0.0
  %297 = vmatpush.msra.mxu0 0.0
  %298 = vmatpush.msra.mxu0 0.0
  %299 = vmatpush.msra.mxu0 0.0
  %300 = vmatpush.msra.mxu0 0.0
  %301 = vmatpush.msra.mxu0 0.0
  %302 = vmatpush.msra.mxu0 %v31
  %303 = vmatpush.msra.mxu0 %v30
  %304 = vmatpush.msra.mxu0 %v29
  %305 = vmatpush.msra.mxu0 %v28
  %306 = vmatmul.f32.gmra.mxu0 %v279
  %v307 = vpop.f32.mrf.mxu0
  %v308 = vadd.f32 0.0, %v307
  %309 = vmatmul.f32.gmra.mxu0 %v282
  %v310 = vpop.f32.mrf.mxu0
  %v311 = vadd.f32 0.0, %v310
  %312 = vmatmul.f32.gmra.mxu0 %v285
  %v313 = vpop.f32.mrf.mxu0
  %v314 = vadd.f32 0.0, %v313
  %315 = vmatmul.f32.gmra.mxu0 %v288
  %v316 = vpop.f32.mrf.mxu0
  %v317 = vadd.f32 0.0, %v316
  %318 = vdwg.mxu0
  %v319 = vadd.f32 %v230, %v308
  %v320 = vadd.f32 %v233, %v311
  %v321 = vadd.f32 %v236, %v314
  %v322 = vadd.f32 %v239, %v317
  %v324 = vsel %vm277, %v218, 0
  %v327 = vsel %vm277, %v221, 0
  %v330 = vsel %vm277, %v224, 0
  %v333 = vsel %vm277, %v227, 0
  %335 = vmatpush.msra.mxu0 0.0
  %336 = vmatpush.msra.mxu0 0.0
  %337 = vmatpush.msra.mxu0 0.0
  %338 = vmatpush.msra.mxu0 0.0
  %339 = vmatpush.msra.mxu0 0.0
  %340 = vmatpush.msra.mxu0 0.0
  %341 = vmatpush.msra.mxu0 0.0
  %342 = vmatpush.msra.mxu0 0.0
  %343 = vmatpush.msra.mxu0 0.0
  %344 = vmatpush.msra.mxu0 0.0
  %345 = vmatpush.msra.mxu0 0.0
  %346 = vmatpush.msra.mxu0 0.0
  %347 = vmatpush.msra.mxu0 %v35
  %348 = vmatpush.msra.mxu0 %v34
  %349 = vmatpush.msra.mxu0 %v33
  %350 = vmatpush.msra.mxu0 %v32
  %351 = vmatmul.f32.gmra.mxu0 %v324
  %v352 = vpop.f32.mrf.mxu0
  %v353 = vadd.f32 0.0, %v352
  %354 = vmatmul.f32.gmra.mxu0 %v327
  %v355 = vpop.f32.mrf.mxu0
  %v356 = vadd.f32 0.0, %v355
  %357 = vmatmul.f32.gmra.mxu0 %v330
  %v358 = vpop.f32.mrf.mxu0
  %v359 = vadd.f32 0.0, %v358
  %360 = vmatmul.f32.gmra.mxu0 %v333
  %v361 = vpop.f32.mrf.mxu0
  %v362 = vadd.f32 0.0, %v361
  %363 = vdwg.mxu0
  %v364 = vadd.f32 %v319, %v353
  %v365 = vadd.f32 %v320, %v356
  %v366 = vadd.f32 %v321, %v359
  %v367 = vadd.f32 %v322, %v362
  %v369 = vsel %vm277, %v242, 0
  %v372 = vsel %vm277, %v245, 0
  %v375 = vsel %vm277, %v248, 0
  %v378 = vsel %vm277, %v251, 0
  %380 = vmatpush.msra.mxu0 0.0
  %381 = vmatpush.msra.mxu0 0.0
  %382 = vmatpush.msra.mxu0 0.0
  %383 = vmatpush.msra.mxu0 0.0
  %384 = vmatpush.msra.mxu0 0.0
  %385 = vmatpush.msra.mxu0 0.0
  %386 = vmatpush.msra.mxu0 0.0
  %387 = vmatpush.msra.mxu0 0.0
  %388 = vmatpush.msra.mxu0 0.0
  %389 = vmatpush.msra.mxu0 0.0
  %390 = vmatpush.msra.mxu0 0.0
  %391 = vmatpush.msra.mxu0 0.0
  %392 = vmatpush.msra.mxu0 %v39
  %393 = vmatpush.msra.mxu0 %v38
  %394 = vmatpush.msra.mxu0 %v37
  %395 = vmatpush.msra.mxu0 %v36
  %396 = vmatmul.f32.gmra.mxu0 %v369
  %v397 = vpop.f32.mrf.mxu0
  %v398 = vadd.f32 0.0, %v397
  %399 = vmatmul.f32.gmra.mxu0 %v372
  %v400 = vpop.f32.mrf.mxu0
  %v401 = vadd.f32 0.0, %v400
  %402 = vmatmul.f32.gmra.mxu0 %v375
  %v403 = vpop.f32.mrf.mxu0
  %v404 = vadd.f32 0.0, %v403
  %405 = vmatmul.f32.gmra.mxu0 %v378
  %v406 = vpop.f32.mrf.mxu0
  %v407 = vadd.f32 0.0, %v406
  %408 = vdwg.mxu0
  %v409 = vadd.f32 %v364, %v398
  %v410 = vadd.f32 %v365, %v401
  %v411 = vadd.f32 %v366, %v404
  %v412 = vadd.f32 %v367, %v407
  %v414 = vsel %vm277, %v254, 0
  %v417 = vsel %vm277, %v257, 0
  %v420 = vsel %vm277, %v260, 0
  %v423 = vsel %vm277, %v263, 0
  %425 = vmatpush.msra.mxu0 0.0
  %426 = vmatpush.msra.mxu0 0.0
  %427 = vmatpush.msra.mxu0 0.0
  %428 = vmatpush.msra.mxu0 0.0
  %429 = vmatpush.msra.mxu0 0.0
  %430 = vmatpush.msra.mxu0 0.0
  %431 = vmatpush.msra.mxu0 0.0
  %432 = vmatpush.msra.mxu0 0.0
  %433 = vmatpush.msra.mxu0 0.0
  %434 = vmatpush.msra.mxu0 0.0
  %435 = vmatpush.msra.mxu0 0.0
  %436 = vmatpush.msra.mxu0 0.0
  %437 = vmatpush.msra.mxu0 %v43
  %438 = vmatpush.msra.mxu0 %v42
  %439 = vmatpush.msra.mxu0 %v41
  %440 = vmatpush.msra.mxu0 %v40
  %441 = vmatmul.f32.gmra.mxu0 %v414
  %v442 = vpop.f32.mrf.mxu0
  %v443 = vadd.f32 0.0, %v442
  %444 = vmatmul.f32.gmra.mxu0 %v417
  %v445 = vpop.f32.mrf.mxu0
  %v446 = vadd.f32 0.0, %v445
  %447 = vmatmul.f32.gmra.mxu0 %v420
  %v448 = vpop.f32.mrf.mxu0
  %v449 = vadd.f32 0.0, %v448
  %450 = vmatmul.f32.gmra.mxu0 %v423
  %v451 = vpop.f32.mrf.mxu0
  %v452 = vadd.f32 0.0, %v451
  %453 = vdwg.mxu0
  %v454 = vadd.f32 %v409, %v443
  %v455 = vadd.f32 %v410, %v446
  %v456 = vadd.f32 %v411, %v449
  %v457 = vadd.f32 %v412, %v452
  %459 = vset.pattern.permute.xlu0 0
  %460 = vperm.xlu0 %459, %v44
  %v461 = vpop.permute.xlu0 %460
  %464 = vset.pattern.permute.xlu0 0
  %465 = vperm.xlu0 %464, %v45
  %v466 = vpop.permute.xlu0 %465
  %469 = vset.pattern.permute.xlu0 0
  %470 = vperm.xlu0 %469, %v46
  %v471 = vpop.permute.xlu0 %470
  %474 = vset.pattern.permute.xlu0 0
  %475 = vperm.xlu0 %474, %v47
  %v476 = vpop.permute.xlu0 %475
  %v478 = vadd.f32 %v454, %v461
  %v479 = vadd.f32 %v455, %v466
  %v480 = vadd.f32 %v456, %v471
  %v481 = vadd.f32 %v457, %v476
  %483 = vset.pattern.permute.xlu0 0
  %484 = vperm.xlu0 %483, %v72
  %v485 = vpop.permute.xlu0 %484
  %488 = vset.pattern.permute.xlu0 0
  %489 = vperm.xlu0 %488, %v73
  %v490 = vpop.permute.xlu0 %489
  %493 = vset.pattern.permute.xlu0 0
  %494 = vperm.xlu0 %493, %v74
  %v495 = vpop.permute.xlu0 %494
  %498 = vset.pattern.permute.xlu0 0
  %499 = vperm.xlu0 %498, %v75
  %v500 = vpop.permute.xlu0 %499
  %v502 = vadd.f32 %v266, %v485
  %v503 = vadd.f32 %v269, %v490
  %v504 = vadd.f32 %v272, %v495
  %v505 = vadd.f32 %v275, %v500
  %v506 = vld [vmem:[%s2 + $0x160] sm:$0xff]
  %v507 = vld [vmem:[%s2 + $0x168] sm:$0xff]
  %v508 = vld [vmem:[%s2 + $0x170] sm:$0xff]
  %v509 = vld [vmem:[%s2 + $0x178] sm:$0xff]
  %v510 = vld [vmem:[%s1] sm:$0xff]
  %v511 = vld [vmem:[%s1 + $0x8] sm:$0xff]
  %v512 = vld [vmem:[%s1 + $0x10] sm:$0xff]
  %v513 = vld [vmem:[%s1 + $0x18] sm:$0xff]
  %v514 = vmin.f32 %v510, 20.0
  %v515 = vmin.f32 %v511, 20.0
  %v516 = vmin.f32 %v512, 20.0
  %v517 = vmin.f32 %v513, 20.0
  %v518 = vmul.f32 %v514, 1.442695
  %v519 = vpow.pop %v518
  %v520 = vmul.f32 %v515, 1.442695
  %v521 = vpow.pop %v520
  %v522 = vmul.f32 %v516, 1.442695
  %v523 = vpow.pop %v522
  %v524 = vmul.f32 %v517, 1.442695
  %v525 = vpow.pop %v524
  %v526 = vmul.f32 %v519, %v519
  %v527 = vmul.f32 %v521, %v521
  %v528 = vmul.f32 %v523, %v523
  %v529 = vmul.f32 %v525, %v525
  %v530 = vmul.f32 %v519, 2.0
  %v531 = vmul.f32 %v521, 2.0
  %v532 = vmul.f32 %v523, 2.0
  %v533 = vmul.f32 %v525, 2.0
  %v534 = vadd.f32 %v526, %v530
  %v535 = vadd.f32 %v527, %v531
  %v536 = vadd.f32 %v528, %v532
  %v537 = vadd.f32 %v529, %v533
  %vm538 = vcmp.gt.f32.partialorder %v510, 20.0
  %vm539 = vcmp.gt.f32.partialorder %v511, 20.0
  %vm540 = vcmp.gt.f32.partialorder %v512, 20.0
  %vm541 = vcmp.gt.f32.partialorder %v513, 20.0
  %v542 = vmul.f32 %v510, %v534
  %v543 = vmul.f32 %v511, %v535
  %v544 = vmul.f32 %v512, %v536
  %v545 = vmul.f32 %v513, %v537
  %v546 = vadd.f32 %v534, 2.0
  %v547 = vadd.f32 %v535, 2.0
  %v548 = vadd.f32 %v536, 2.0
  %v549 = vadd.f32 %v537, 2.0
  %v550 = vrcp.pop %v546
  %v551 = vmul.f32 %v546, %v550
  %v552 = vsub.f32 1.0, %v551
  %v553 = vmul.f32 %v550, %v552
  %v554 = vadd.f32 %v550, %v553
  %vm555 = vweird.f32 %v546
  %vm556 = vweird.f32 %v550
  %vm557 = vmor %vm555, %vm556
  %v558 = vsel %vm557, %v550, %v554
  %v559 = vand.u32 2147483647, %v546
  %vm560 = vcmp.eq.f32.partialorder %v559, 8.507059e+37
  %v561 = vand.u32 %v546, 2147483648
  %v562 = vor.u32 1.1754944e-38, %v561
  %v563 = vsel %vm560, %v562, %v558
  %v564 = vmul.f32 %v542, %v563
  %v565 = vrcp.pop %v547
  %v566 = vmul.f32 %v547, %v565
  %v567 = vsub.f32 1.0, %v566
  %v568 = vmul.f32 %v565, %v567
  %v569 = vadd.f32 %v565, %v568
  %vm570 = vweird.f32 %v547
  %vm571 = vweird.f32 %v565
  %vm572 = vmor %vm570, %vm571
  %v573 = vsel %vm572, %v565, %v569
  %v574 = vand.u32 2147483647, %v547
  %vm575 = vcmp.eq.f32.partialorder %v574, 8.507059e+37
  %v576 = vand.u32 %v547, 2147483648
  %v577 = vor.u32 1.1754944e-38, %v576
  %v578 = vsel %vm575, %v577, %v573
  %v579 = vmul.f32 %v543, %v578
  %v580 = vrcp.pop %v548
  %v581 = vmul.f32 %v548, %v580
  %v582 = vsub.f32 1.0, %v581
  %v583 = vmul.f32 %v580, %v582
  %v584 = vadd.f32 %v580, %v583
  %vm585 = vweird.f32 %v548
  %vm586 = vweird.f32 %v580
  %vm587 = vmor %vm585, %vm586
  %v588 = vsel %vm587, %v580, %v584
  %v589 = vand.u32 2147483647, %v548
  %vm590 = vcmp.eq.f32.partialorder %v589, 8.507059e+37
  %v591 = vand.u32 %v548, 2147483648
  %v592 = vor.u32 1.1754944e-38, %v591
  %v593 = vsel %vm590, %v592, %v588
  %v594 = vmul.f32 %v544, %v593
  %v595 = vrcp.pop %v549
  %v596 = vmul.f32 %v549, %v595
  %v597 = vsub.f32 1.0, %v596
  %v598 = vmul.f32 %v595, %v597
  %v599 = vadd.f32 %v595, %v598
  %vm600 = vweird.f32 %v549
  %vm601 = vweird.f32 %v595
  %vm602 = vmor %vm600, %vm601
  %v603 = vsel %vm602, %v595, %v599
  %v604 = vand.u32 2147483647, %v549
  %vm605 = vcmp.eq.f32.partialorder %v604, 8.507059e+37
  %v606 = vand.u32 %v549, 2147483648
  %v607 = vor.u32 1.1754944e-38, %v606
  %v608 = vsel %vm605, %v607, %v603
  %v609 = vmul.f32 %v545, %v608
  %v610 = vsel %vm538, %v510, %v564
  %v611 = vsel %vm539, %v511, %v579
  %v612 = vsel %vm540, %v512, %v594
  %v613 = vsel %vm541, %v513, %v609
  %615 = vset.pattern.permute.xlu0 0
  %616 = vperm.xlu0 %615, %v68
  %v617 = vpop.permute.xlu0 %616
  %620 = vset.pattern.permute.xlu0 0
  %621 = vperm.xlu0 %620, %v69
  %v622 = vpop.permute.xlu0 %621
  %625 = vset.pattern.permute.xlu0 0
  %626 = vperm.xlu0 %625, %v70
  %v627 = vpop.permute.xlu0 %626
  %630 = vset.pattern.permute.xlu0 0
  %631 = vperm.xlu0 %630, %v71
  %v632 = vpop.permute.xlu0 %631
  %v635 = vsel %vm277, %v506, 0
  %v638 = vsel %vm277, %v507, 0
  %v641 = vsel %vm277, %v508, 0
  %v644 = vsel %vm277, %v509, 0
  %646 = vmatpush.msra.mxu0 0.0
  %647 = vmatpush.msra.mxu0 0.0
  %648 = vmatpush.msra.mxu0 0.0
  %649 = vmatpush.msra.mxu0 0.0
  %650 = vmatpush.msra.mxu0 0.0
  %651 = vmatpush.msra.mxu0 0.0
  %652 = vmatpush.msra.mxu0 0.0
  %653 = vmatpush.msra.mxu0 0.0
  %654 = vmatpush.msra.mxu0 0.0
  %655 = vmatpush.msra.mxu0 0.0
  %656 = vmatpush.msra.mxu0 0.0
  %657 = vmatpush.msra.mxu0 0.0
  %658 = vmatpush.msra.mxu0 %v613
  %659 = vmatpush.msra.mxu0 %v612
  %660 = vmatpush.msra.mxu0 %v611
  %661 = vmatpush.msra.mxu0 %v610
  %662 = vmatmul.f32.gmra.mxu0 %v635
  %v663 = vpop.f32.mrf.mxu0
  %v664 = vadd.f32 %v617, %v663
  %665 = vmatmul.f32.gmra.mxu0 %v638
  %v666 = vpop.f32.mrf.mxu0
  %v667 = vadd.f32 %v622, %v666
  %668 = vmatmul.f32.gmra.mxu0 %v641
  %v669 = vpop.f32.mrf.mxu0
  %v670 = vadd.f32 %v627, %v669
  %671 = vmatmul.f32.gmra.mxu0 %v644
  %v672 = vpop.f32.mrf.mxu0
  %v673 = vadd.f32 %v632, %v672
  %674 = vdwg.mxu0
  %v676 = vsel %vm277, %v19, 0
  %678 = vmatpush.msra.mxu0 0.0
  %679 = vmatpush.msra.mxu0 0.0
  %680 = vmatpush.msra.mxu0 0.0
  %681 = vmatpush.msra.mxu0 0.0
  %682 = vmatpush.msra.mxu0 0.0
  %683 = vmatpush.msra.mxu0 0.0
  %684 = vmatpush.msra.mxu0 0.0
  %685 = vmatpush.msra.mxu0 0.0
  %686 = vmatpush.msra.mxu0 0.0
  %687 = vmatpush.msra.mxu0 0.0
  %688 = vmatpush.msra.mxu0 0.0
  %689 = vmatpush.msra.mxu0 0.0
  %690 = vmatpush.msra.mxu0 %v481
  %691 = vmatpush.msra.mxu0 %v480
  %692 = vmatpush.msra.mxu0 %v479
  %693 = vmatpush.msra.mxu0 %v478
  %694 = vmatmul.f32.gmra.mxu0 %v676
  %v695 = vpop.f32.mrf.mxu0
  %v696 = vadd.f32 0.0, %v695
  %697 = vdwg.mxu0
  %v698 = vmul.f32 %v478, %v478
  %v699 = vmul.f32 %v479, %v479
  %v700 = vmul.f32 %v480, %v480
  %v701 = vmul.f32 %v481, %v481
  %702 = vmatpush.msra.mxu0 0.0
  %703 = vmatpush.msra.mxu0 0.0
  %704 = vmatpush.msra.mxu0 0.0
  %705 = vmatpush.msra.mxu0 0.0
  %706 = vmatpush.msra.mxu0 0.0
  %707 = vmatpush.msra.mxu0 0.0
  %708 = vmatpush.msra.mxu0 0.0
  %709 = vmatpush.msra.mxu0 0.0
  %710 = vmatpush.msra.mxu0 0.0
  %711 = vmatpush.msra.mxu0 0.0
  %712 = vmatpush.msra.mxu0 0.0
  %713 = vmatpush.msra.mxu0 0.0
  %714 = vmatpush.msra.mxu0 %v701
  %715 = vmatpush.msra.mxu0 %v700
  %716 = vmatpush.msra.mxu0 %v699
  %717 = vmatpush.msra.mxu0 %v698
  %718 = vmatmul.f32.gmra.mxu0 %v676
  %v719 = vpop.f32.mrf.mxu0
  %v720 = vadd.f32 0.0, %v719
  %721 = vdwg.mxu0
  %v723 = vsel %vm277, %v696, 0
  %v726 = vsel %vm277, %v720, 0
  %728 = vmatpush.msra.mxu0 0.0
  %729 = vmatpush.msra.mxu0 0.0
  %730 = vmatpush.msra.mxu0 0.0
  %731 = vmatpush.msra.mxu0 0.0
  %732 = vmatpush.msra.mxu0 0.0
  %733 = vmatpush.msra.mxu0 0.0
  %734 = vmatpush.msra.mxu0 0.0
  %735 = vmatpush.msra.mxu0 0.0
  %736 = vmatpush.msra.mxu0 0.0
  %737 = vmatpush.msra.mxu0 0.0
  %738 = vmatpush.msra.mxu0 0.0
  %739 = vmatpush.msra.mxu0 0.0
  %740 = vmatpush.msra.mxu0 %v18
  %741 = vmatpush.msra.mxu0 %v17
  %742 = vmatpush.msra.mxu0 %v16
  %743 = vmatpush.msra.mxu0 %v15
  %744 = vmatmul.f32.gmra.mxu0 %v723
  %v745 = vpop.f32.mrf.mxu0
  %v746 = vadd.f32 0.0, %v745
  %747 = vmatmul.f32.gmra.mxu0 %v726
  %v748 = vpop.f32.mrf.mxu0
  %v749 = vadd.f32 0.0, %v748
  %750 = vdwg.mxu0
  %v751 = vmul.f32 %v746, 0.015625
  %v752 = vmul.f32 %v749, 0.015625
  %v753 = vmul.f32 %v751, %v751
  %v754 = vsub.f32 %v752, %v753
  %v755 = vadd.f32 %v754, 1e-05
  %v756 = vrsqrt.pop %v755
  %v757 = vmul.f32 %v756, %v755
  %v758 = vmul.f32 %v757, %v756
  %v759 = vmul.f32 0.5, %v758
  %v760 = vsub.f32 1.5, %v759
  %v761 = vmul.f32 %v756, %v760
  %vm762 = vweird.f32 %v755
  %vm763 = vweird.f32 %v756
  %vm764 = vmor %vm762, %vm763
  %v765 = vsel %vm764, %v756, %v761
  %v766 = vmul.f32 %v751, %v765
  %v768 = vsel %vm89, %v20, 0
  %v771 = vsel %vm89, %v21, 0
  %v774 = vsel %vm89, %v22, 0
  %v777 = vsel %vm89, %v23, 0
  %v780 = vsel %vm89, %v24, 0
  %v783 = vsel %vm89, %v25, 0
  %v786 = vsel %vm89, %v26, 0
  %v789 = vsel %vm89, %v27, 0
  %791 = vmatpush.msra.mxu0 0.0
  %792 = vmatpush.msra.mxu0 0.0
  %793 = vmatpush.msra.mxu0 0.0
  %794 = vmatpush.msra.mxu0 0.0
  %795 = vmatpush.msra.mxu0 0.0
  %796 = vmatpush.msra.mxu0 0.0
  %797 = vmatpush.msra.mxu0 0.0
  %798 = vmatpush.msra.mxu0 0.0
  %799 = vmatpush.msra.mxu0 0.0
  %800 = vmatpush.msra.mxu0 0.0
  %801 = vmatpush.msra.mxu0 0.0
  %802 = vmatpush.msra.mxu0 0.0
  %803 = vmatpush.msra.mxu0 0.0
  %804 = vmatpush.msra.mxu0 0.0
  %805 = vmatpush.msra.mxu0 %v766
  %806 = vmatpush.msra.mxu0 %v765
  %807 = vmatmul.f32.gmra.mxu0 %v768
  %v808 = vpop.f32.mrf.mxu0
  %v809 = vadd.f32 0.0, %v808
  %810 = vmatmul.f32.gmra.mxu0 %v771
  %v811 = vpop.f32.mrf.mxu0
  %v812 = vadd.f32 0.0, %v811
  %813 = vmatmul.f32.gmra.mxu0 %v774
  %v814 = vpop.f32.mrf.mxu0
  %v815 = vadd.f32 0.0, %v814
  %816 = vmatmul.f32.gmra.mxu0 %v777
  %v817 = vpop.f32.mrf.mxu0
  %v818 = vadd.f32 0.0, %v817
  %819 = vmatmul.f32.gmra.mxu0 %v780
  %v820 = vpop.f32.mrf.mxu0
  %v821 = vadd.f32 0.0, %v820
  %822 = vmatmul.f32.gmra.mxu0 %v783
  %v823 = vpop.f32.mrf.mxu0
  %v824 = vadd.f32 0.0, %v823
  %825 = vmatmul.f32.gmra.mxu0 %v786
  %v826 = vpop.f32.mrf.mxu0
  %v827 = vadd.f32 0.0, %v826
  %828 = vmatmul.f32.gmra.mxu0 %v789
  %v829 = vpop.f32.mrf.mxu0
  %v830 = vadd.f32 0.0, %v829
  %831 = vdwg.mxu0
  %833 = vset.pattern.permute.xlu0 0
  %834 = vperm.xlu0 %833, %v48
  %v835 = vpop.permute.xlu0 %834
  %838 = vset.pattern.permute.xlu0 0
  %839 = vperm.xlu0 %838, %v49
  %v840 = vpop.permute.xlu0 %839
  %843 = vset.pattern.permute.xlu0 0
  %844 = vperm.xlu0 %843, %v50
  %v845 = vpop.permute.xlu0 %844
  %848 = vset.pattern.permute.xlu0 0
  %849 = vperm.xlu0 %848, %v51
  %v850 = vpop.permute.xlu0 %849
  %v852 = vmul.f32 %v809, %v835
  %v853 = vmul.f32 %v812, %v840
  %v854 = vmul.f32 %v815, %v845
  %v855 = vmul.f32 %v818, %v850
  %v856 = vmul.f32 %v821, %v835
  %v857 = vmul.f32 %v824, %v840
  %v858 = vmul.f32 %v827, %v845
  %v859 = vmul.f32 %v830, %v850
  %861 = vset.pattern.permute.xlu0 0
  %862 = vperm.xlu0 %861, %v52
  %v863 = vpop.permute.xlu0 %862
  %866 = vset.pattern.permute.xlu0 0
  %867 = vperm.xlu0 %866, %v53
  %v868 = vpop.permute.xlu0 %867
  %871 = vset.pattern.permute.xlu0 0
  %872 = vperm.xlu0 %871, %v54
  %v873 = vpop.permute.xlu0 %872
  %876 = vset.pattern.permute.xlu0 0
  %877 = vperm.xlu0 %876, %v55
  %v878 = vpop.permute.xlu0 %877
  %v880 = vsub.f32 %v863, %v856
  %v881 = vsub.f32 %v868, %v857
  %v882 = vsub.f32 %v873, %v858
  %v883 = vsub.f32 %v878, %v859
  %vm884 = vcmask 15360
  %v886 = vsel %vm884, %v852, 0
  %v889 = vsel %vm884, %v853, 0
  %v892 = vsel %vm884, %v854, 0
  %v895 = vsel %vm884, %v855, 0
  %v898 = vsel %vm884, %v880, 0
  %v901 = vsel %vm884, %v881, 0
  %v904 = vsel %vm884, %v882, 0
  %v907 = vsel %vm884, %v883, 0
  %v910 = vsel %vm884, %v664, 0
  %v913 = vsel %vm884, %v667, 0
  %v916 = vsel %vm884, %v670, 0
  %v919 = vsel %vm884, %v673, 0
  %vm921 = vcmask 1041408
  %v923 = vsel %vm921, %v14, 0
  %925 = vmatpush.msra.mxu0 0.0
  %926 = vmatpush.msra.mxu0 0.0
  %927 = vmatpush.msra.mxu0 0.0
  %928 = vmatpush.msra.mxu0 0.0
  %929 = vmatpush.msra.mxu0 0.0
  %930 = vmatpush.msra.mxu0 0.0
  %931 = vmatpush.msra.mxu0 0.0
  %932 = vmatpush.msra.mxu0 0.0
  %933 = vmatpush.msra.mxu0 0.0
  %934 = vmatpush.msra.mxu0 0.0
  %935 = vmatpush.msra.mxu0 0.0
  %936 = vmatpush.msra.mxu0 0.0
  %937 = vmatpush.msra.mxu0 0.0
  %938 = vmatpush.msra.mxu0 0.0
  %939 = vmatpush.msra.mxu0 0.0
  %940 = vmatpush.msra.mxu0 %v923
  %941 = vmatmul.f32.gmra.mxu0 %v886
  %v942 = vpop.f32.mrf.mxu0
  %v943 = vadd.f32 0.0, %v942
  %944 = vmatmul.f32.gmra.mxu0 %v889
  %v945 = vpop.f32.mrf.mxu0
  %v946 = vadd.f32 0.0, %v945
  %947 = vmatmul.f32.gmra.mxu0 %v892
  %v948 = vpop.f32.mrf.mxu0
  %v949 = vadd.f32 0.0, %v948
  %950 = vmatmul.f32.gmra.mxu0 %v895
  %v951 = vpop.f32.mrf.mxu0
  %v952 = vadd.f32 0.0, %v951
  %953 = vmatmul.f32.gmra.mxu0 %v898
  %v954 = vpop.f32.mrf.mxu0
  %v955 = vadd.f32 0.0, %v954
  %956 = vmatmul.f32.gmra.mxu0 %v901
  %v957 = vpop.f32.mrf.mxu0
  %v958 = vadd.f32 0.0, %v957
  %959 = vmatmul.f32.gmra.mxu0 %v904
  %v960 = vpop.f32.mrf.mxu0
  %v961 = vadd.f32 0.0, %v960
  %962 = vmatmul.f32.gmra.mxu0 %v907
  %v963 = vpop.f32.mrf.mxu0
  %v964 = vadd.f32 0.0, %v963
  %965 = vmatmul.f32.gmra.mxu0 %v910
  %v966 = vpop.f32.mrf.mxu0
  %v967 = vadd.f32 0.0, %v966
  %968 = vmatmul.f32.gmra.mxu0 %v913
  %v969 = vpop.f32.mrf.mxu0
  %v970 = vadd.f32 0.0, %v969
  %971 = vmatmul.f32.gmra.mxu0 %v916
  %v972 = vpop.f32.mrf.mxu0
  %v973 = vadd.f32 0.0, %v972
  %974 = vmatmul.f32.gmra.mxu0 %v919
  %v975 = vpop.f32.mrf.mxu0
  %v976 = vadd.f32 0.0, %v975
  %977 = vdwg.mxu0
  %v978 = vmul.f32 %v478, %v943
  %v979 = vmul.f32 %v479, %v946
  %v980 = vmul.f32 %v480, %v949
  %v981 = vmul.f32 %v481, %v952
  %v982 = vadd.f32 %v978, %v955
  %v983 = vadd.f32 %v979, %v958
  %v984 = vadd.f32 %v980, %v961
  %v985 = vadd.f32 %v981, %v964
  %v986 = vmin.f32 %v982, 20.0
  %v987 = vmin.f32 %v983, 20.0
  %v988 = vmin.f32 %v984, 20.0
  %v989 = vmin.f32 %v985, 20.0
  %v990 = vmul.f32 %v986, 1.442695
  %v991 = vpow.pop %v990
  %v992 = vmul.f32 %v987, 1.442695
  %v993 = vpow.pop %v992
  %v994 = vmul.f32 %v988, 1.442695
  %v995 = vpow.pop %v994
  %v996 = vmul.f32 %v989, 1.442695
  %v997 = vpow.pop %v996
  %v998 = vmul.f32 %v991, %v991
  %v999 = vmul.f32 %v993, %v993
  %v1000 = vmul.f32 %v995, %v995
  %v1001 = vmul.f32 %v997, %v997
  %v1002 = vmul.f32 %v991, 2.0
  %v1003 = vmul.f32 %v993, 2.0
  %v1004 = vmul.f32 %v995, 2.0
  %v1005 = vmul.f32 %v997, 2.0
  %v1006 = vadd.f32 %v998, %v1002
  %v1007 = vadd.f32 %v999, %v1003
  %v1008 = vadd.f32 %v1000, %v1004
  %v1009 = vadd.f32 %v1001, %v1005
  %vm1010 = vcmp.gt.f32.partialorder %v982, 20.0
  %vm1011 = vcmp.gt.f32.partialorder %v983, 20.0
  %vm1012 = vcmp.gt.f32.partialorder %v984, 20.0
  %vm1013 = vcmp.gt.f32.partialorder %v985, 20.0
  %v1014 = vmul.f32 %v982, %v1006
  %v1015 = vmul.f32 %v983, %v1007
  %v1016 = vmul.f32 %v984, %v1008
  %v1017 = vmul.f32 %v985, %v1009
  %v1018 = vadd.f32 %v1006, 2.0
  %v1019 = vadd.f32 %v1007, 2.0
  %v1020 = vadd.f32 %v1008, 2.0
  %v1021 = vadd.f32 %v1009, 2.0
  %v1022 = vrcp.pop %v1018
  %v1023 = vmul.f32 %v1018, %v1022
  %v1024 = vsub.f32 1.0, %v1023
  %v1025 = vmul.f32 %v1022, %v1024
  %v1026 = vadd.f32 %v1022, %v1025
  %vm1027 = vweird.f32 %v1018
  %vm1028 = vweird.f32 %v1022
  %vm1029 = vmor %vm1027, %vm1028
  %v1030 = vsel %vm1029, %v1022, %v1026
  %v1031 = vand.u32 2147483647, %v1018
  %vm1032 = vcmp.eq.f32.partialorder %v1031, 8.507059e+37
  %v1033 = vand.u32 %v1018, 2147483648
  %v1034 = vor.u32 1.1754944e-38, %v1033
  %v1035 = vsel %vm1032, %v1034, %v1030
  %v1036 = vmul.f32 %v1014, %v1035
  %v1037 = vrcp.pop %v1019
  %v1038 = vmul.f32 %v1019, %v1037
  %v1039 = vsub.f32 1.0, %v1038
  %v1040 = vmul.f32 %v1037, %v1039
  %v1041 = vadd.f32 %v1037, %v1040
  %vm1042 = vweird.f32 %v1019
  %vm1043 = vweird.f32 %v1037
  %vm1044 = vmor %vm1042, %vm1043
  %v1045 = vsel %vm1044, %v1037, %v1041
  %v1046 = vand.u32 2147483647, %v1019
  %vm1047 = vcmp.eq.f32.partialorder %v1046, 8.507059e+37
  %v1048 = vand.u32 %v1019, 2147483648
  %v1049 = vor.u32 1.1754944e-38, %v1048
  %v1050 = vsel %vm1047, %v1049, %v1045
  %v1051 = vmul.f32 %v1015, %v1050
  %v1052 = vrcp.pop %v1020
  %v1053 = vmul.f32 %v1020, %v1052
  %v1054 = vsub.f32 1.0, %v1053
  %v1055 = vmul.f32 %v1052, %v1054
  %v1056 = vadd.f32 %v1052, %v1055
  %vm1057 = vweird.f32 %v1020
  %vm1058 = vweird.f32 %v1052
  %vm1059 = vmor %vm1057, %vm1058
  %v1060 = vsel %vm1059, %v1052, %v1056
  %v1061 = vand.u32 2147483647, %v1020
  %vm1062 = vcmp.eq.f32.partialorder %v1061, 8.507059e+37
  %v1063 = vand.u32 %v1020, 2147483648
  %v1064 = vor.u32 1.1754944e-38, %v1063
  %v1065 = vsel %vm1062, %v1064, %v1060
  %v1066 = vmul.f32 %v1016, %v1065
  %v1067 = vrcp.pop %v1021
  %v1068 = vmul.f32 %v1021, %v1067
  %v1069 = vsub.f32 1.0, %v1068
  %v1070 = vmul.f32 %v1067, %v1069
  %v1071 = vadd.f32 %v1067, %v1070
  %vm1072 = vweird.f32 %v1021
  %vm1073 = vweird.f32 %v1067
  %vm1074 = vmor %vm1072, %vm1073
  %v1075 = vsel %vm1074, %v1067, %v1071
  %v1076 = vand.u32 2147483647, %v1021
  %vm1077 = vcmp.eq.f32.partialorder %v1076, 8.507059e+37
  %v1078 = vand.u32 %v1021, 2147483648
  %v1079 = vor.u32 1.1754944e-38, %v1078
  %v1080 = vsel %vm1077, %v1079, %v1075
  %v1081 = vmul.f32 %v1017, %v1080
  %v1082 = vsel %vm1010, %v982, %v1036
  %v1083 = vsel %vm1011, %v983, %v1051
  %v1084 = vsel %vm1012, %v984, %v1066
  %v1085 = vsel %vm1013, %v985, %v1081
  %v1086 = vadd.f32 %v1082, %v967
  %v1087 = vadd.f32 %v1083, %v970
  %v1088 = vadd.f32 %v1084, %v973
  %v1089 = vadd.f32 %v1085, %v976
  %v1090 = vld [vmem:[%s2 + $0xc0] sm:$0xff]
  %v1091 = vld [vmem:[%s2 + $0xc8] sm:$0xff]
  %v1092 = vld [vmem:[%s2 + $0xd0] sm:$0xff]
  %v1093 = vld [vmem:[%s2 + $0xd8] sm:$0xff]
  %v1094 = vld [vmem:[%s2 + $0xe0] sm:$0xff]
  %v1095 = vld [vmem:[%s2 + $0xe8] sm:$0xff]
  %v1096 = vld [vmem:[%s2 + $0xf0] sm:$0xff]
  %v1097 = vld [vmem:[%s2 + $0xf8] sm:$0xff]
  %v1098 = vld [vmem:[%s2 + $0x100] sm:$0xff]
  %v1099 = vld [vmem:[%s2 + $0x108] sm:$0xff]
  %v1100 = vld [vmem:[%s2 + $0x110] sm:$0xff]
  %v1101 = vld [vmem:[%s2 + $0x118] sm:$0xff]
  %v1102 = vld [vmem:[%s2 + $0x120] sm:$0xff]
  %v1103 = vld [vmem:[%s2 + $0x128] sm:$0xff]
  %v1104 = vld [vmem:[%s2 + $0x130] sm:$0xff]
  %v1105 = vld [vmem:[%s2 + $0x138] sm:$0xff]
  %v1106 = vld [vmem:[%s2 + $0x140] sm:$0xff]
  %v1107 = vld [vmem:[%s2 + $0x148] sm:$0xff]
  %v1108 = vld [vmem:[%s2 + $0x150] sm:$0xff]
  %v1109 = vld [vmem:[%s2 + $0x158] sm:$0xff]
  %v1111 = vsel %vm277, %v1090, 0
  %v1114 = vsel %vm277, %v1091, 0
  %v1117 = vsel %vm277, %v1092, 0
  %v1120 = vsel %vm277, %v1093, 0
  %v1123 = vsel %vm277, %v1094, 0
  %v1126 = vsel %vm277, %v1095, 0
  %v1129 = vsel %vm277, %v1096, 0
  %v1132 = vsel %vm277, %v1097, 0
  %v1135 = vsel %vm277, %v1098, 0
  %v1138 = vsel %vm277, %v1099, 0
  %v1141 = vsel %vm277, %v1100, 0
  %v1144 = vsel %vm277, %v1101, 0
  %v1147 = vsel %vm277, %v1102, 0
  %v1150 = vsel %vm277, %v1103, 0
  %v1153 = vsel %vm277, %v1104, 0
  %v1156 = vsel %vm277, %v1105, 0
  %v1159 = vsel %vm277, %v1106, 0
  %v1162 = vsel %vm277, %v1107, 0
  %v1165 = vsel %vm277, %v1108, 0
  %v1168 = vsel %vm277, %v1109, 0
  %1170 = vmatpush.msra.mxu0 0.0
  %1171 = vmatpush.msra.mxu0 0.0
  %1172 = vmatpush.msra.mxu0 0.0
  %1173 = vmatpush.msra.mxu0 0.0
  %1174 = vmatpush.msra.mxu0 0.0
  %1175 = vmatpush.msra.mxu0 0.0
  %1176 = vmatpush.msra.mxu0 0.0
  %1177 = vmatpush.msra.mxu0 0.0
  %1178 = vmatpush.msra.mxu0 0.0
  %1179 = vmatpush.msra.mxu0 0.0
  %1180 = vmatpush.msra.mxu0 0.0
  %1181 = vmatpush.msra.mxu0 0.0
  %1182 = vmatpush.msra.mxu0 %v1089
  %1183 = vmatpush.msra.mxu0 %v1088
  %1184 = vmatpush.msra.mxu0 %v1087
  %1185 = vmatpush.msra.mxu0 %v1086
  %1186 = vmatmul.f32.gmra.mxu0 %v1111
  %v1187 = vpop.f32.mrf.mxu0
  %v1188 = vadd.f32 0.0, %v1187
  %1189 = vmatmul.f32.gmra.mxu0 %v1114
  %v1190 = vpop.f32.mrf.mxu0
  %v1191 = vadd.f32 0.0, %v1190
  %1192 = vmatmul.f32.gmra.mxu0 %v1117
  %v1193 = vpop.f32.mrf.mxu0
  %v1194 = vadd.f32 0.0, %v1193
  %1195 = vmatmul.f32.gmra.mxu0 %v1120
  %v1196 = vpop.f32.mrf.mxu0
  %v1197 = vadd.f32 0.0, %v1196
  %1198 = vmatmul.f32.gmra.mxu0 %v1123
  %v1199 = vpop.f32.mrf.mxu0
  %v1200 = vadd.f32 0.0, %v1199
  %1201 = vmatmul.f32.gmra.mxu0 %v1126
  %v1202 = vpop.f32.mrf.mxu0
  %v1203 = vadd.f32 0.0, %v1202
  %1204 = vmatmul.f32.gmra.mxu0 %v1129
  %v1205 = vpop.f32.mrf.mxu0
  %v1206 = vadd.f32 0.0, %v1205
  %1207 = vmatmul.f32.gmra.mxu0 %v1132
  %v1208 = vpop.f32.mrf.mxu0
  %v1209 = vadd.f32 0.0, %v1208
  %1210 = vmatmul.f32.gmra.mxu0 %v1135
  %v1211 = vpop.f32.mrf.mxu0
  %v1212 = vadd.f32 0.0, %v1211
  %1213 = vmatmul.f32.gmra.mxu0 %v1138
  %v1214 = vpop.f32.mrf.mxu0
  %v1215 = vadd.f32 0.0, %v1214
  %1216 = vmatmul.f32.gmra.mxu0 %v1141
  %v1217 = vpop.f32.mrf.mxu0
  %v1218 = vadd.f32 0.0, %v1217
  %1219 = vmatmul.f32.gmra.mxu0 %v1144
  %v1220 = vpop.f32.mrf.mxu0
  %v1221 = vadd.f32 0.0, %v1220
  %1222 = vmatmul.f32.gmra.mxu0 %v1147
  %v1223 = vpop.f32.mrf.mxu0
  %v1224 = vadd.f32 0.0, %v1223
  %1225 = vmatmul.f32.gmra.mxu0 %v1150
  %v1226 = vpop.f32.mrf.mxu0
  %v1227 = vadd.f32 0.0, %v1226
  %1228 = vmatmul.f32.gmra.mxu0 %v1153
  %v1229 = vpop.f32.mrf.mxu0
  %v1230 = vadd.f32 0.0, %v1229
  %1231 = vmatmul.f32.gmra.mxu0 %v1156
  %v1232 = vpop.f32.mrf.mxu0
  %v1233 = vadd.f32 0.0, %v1232
  %1234 = vmatmul.f32.gmra.mxu0 %v1159
  %v1235 = vpop.f32.mrf.mxu0
  %v1236 = vadd.f32 0.0, %v1235
  %1237 = vmatmul.f32.gmra.mxu0 %v1162
  %v1238 = vpop.f32.mrf.mxu0
  %v1239 = vadd.f32 0.0, %v1238
  %1240 = vmatmul.f32.gmra.mxu0 %v1165
  %v1241 = vpop.f32.mrf.mxu0
  %v1242 = vadd.f32 0.0, %v1241
  %1243 = vmatmul.f32.gmra.mxu0 %v1168
  %v1244 = vpop.f32.mrf.mxu0
  %v1245 = vadd.f32 0.0, %v1244
  %1246 = vdwg.mxu0
  %v1248 = vsel %vm277, %v1188, 0
  %v1251 = vsel %vm277, %v1191, 0
  %v1254 = vsel %vm277, %v1194, 0
  %v1257 = vsel %vm277, %v1197, 0
  %1259 = vmatpush.msra.mxu0 0.0
  %1260 = vmatpush.msra.mxu0 0.0
  %1261 = vmatpush.msra.mxu0 0.0
  %1262 = vmatpush.msra.mxu0 0.0
  %1263 = vmatpush.msra.mxu0 0.0
  %1264 = vmatpush.msra.mxu0 0.0
  %1265 = vmatpush.msra.mxu0 0.0
  %1266 = vmatpush.msra.mxu0 0.0
  %1267 = vmatpush.msra.mxu0 0.0
  %1268 = vmatpush.msra.mxu0 0.0
  %1269 = vmatpush.msra.mxu0 0.0
  %1270 = vmatpush.msra.mxu0 0.0
  %1271 = vmatpush.msra.mxu0 %v31
  %1272 = vmatpush.msra.mxu0 %v30
  %1273 = vmatpush.msra.mxu0 %v29
  %1274 = vmatpush.msra.mxu0 %v28
  %1275 = vmatmul.f32.gmra.mxu0 %v1248
  %v1276 = vpop.f32.mrf.mxu0
  %v1277 = vadd.f32 0.0, %v1276
  %1278 = vmatmul.f32.gmra.mxu0 %v1251
  %v1279 = vpop.f32.mrf.mxu0
  %v1280 = vadd.f32 0.0, %v1279
  %1281 = vmatmul.f32.gmra.mxu0 %v1254
  %v1282 = vpop.f32.mrf.mxu0
  %v1283 = vadd.f32 0.0, %v1282
  %1284 = vmatmul.f32.gmra.mxu0 %v1257
  %v1285 = vpop.f32.mrf.mxu0
  %v1286 = vadd.f32 0.0, %v1285
  %1287 = vdwg.mxu0
  %v1288 = vadd.f32 %v1212, %v1277
  %v1289 = vadd.f32 %v1215, %v1280
  %v1290 = vadd.f32 %v1218, %v1283
  %v1291 = vadd.f32 %v1221, %v1286
  %v1293 = vsel %vm277, %v1200, 0
  %v1296 = vsel %vm277, %v1203, 0
  %v1299 = vsel %vm277, %v1206, 0
  %v1302 = vsel %vm277, %v1209, 0
  %1304 = vmatpush.msra.mxu0 0.0
  %1305 = vmatpush.msra.mxu0 0.0
  %1306 = vmatpush.msra.mxu0 0.0
  %1307 = vmatpush.msra.mxu0 0.0
  %1308 = vmatpush.msra.mxu0 0.0
  %1309 = vmatpush.msra.mxu0 0.0
  %1310 = vmatpush.msra.mxu0 0.0
  %1311 = vmatpush.msra.mxu0 0.0
  %1312 = vmatpush.msra.mxu0 0.0
  %1313 = vmatpush.msra.mxu0 0.0
  %1314 = vmatpush.msra.mxu0 0.0
  %1315 = vmatpush.msra.mxu0 0.0
  %1316 = vmatpush.msra.mxu0 %v35
  %1317 = vmatpush.msra.mxu0 %v34
  %1318 = vmatpush.msra.mxu0 %v33
  %1319 = vmatpush.msra.mxu0 %v32
  %1320 = vmatmul.f32.gmra.mxu0 %v1293
  %v1321 = vpop.f32.mrf.mxu0
  %v1322 = vadd.f32 0.0, %v1321
  %1323 = vmatmul.f32.gmra.mxu0 %v1296
  %v1324 = vpop.f32.mrf.mxu0
  %v1325 = vadd.f32 0.0, %v1324
  %1326 = vmatmul.f32.gmra.mxu0 %v1299
  %v1327 = vpop.f32.mrf.mxu0
  %v1328 = vadd.f32 0.0, %v1327
  %1329 = vmatmul.f32.gmra.mxu0 %v1302
  %v1330 = vpop.f32.mrf.mxu0
  %v1331 = vadd.f32 0.0, %v1330
  %1332 = vdwg.mxu0
  %v1333 = vadd.f32 %v1288, %v1322
  %v1334 = vadd.f32 %v1289, %v1325
  %v1335 = vadd.f32 %v1290, %v1328
  %v1336 = vadd.f32 %v1291, %v1331
  %v1338 = vsel %vm277, %v1224, 0
  %v1341 = vsel %vm277, %v1227, 0
  %v1344 = vsel %vm277, %v1230, 0
  %v1347 = vsel %vm277, %v1233, 0
  %1349 = vmatpush.msra.mxu0 0.0
  %1350 = vmatpush.msra.mxu0 0.0
  %1351 = vmatpush.msra.mxu0 0.0
  %1352 = vmatpush.msra.mxu0 0.0
  %1353 = vmatpush.msra.mxu0 0.0
  %1354 = vmatpush.msra.mxu0 0.0
  %1355 = vmatpush.msra.mxu0 0.0
  %1356 = vmatpush.msra.mxu0 0.0
  %1357 = vmatpush.msra.mxu0 0.0
  %1358 = vmatpush.msra.mxu0 0.0
  %1359 = vmatpush.msra.mxu0 0.0
  %1360 = vmatpush.msra.mxu0 0.0
  %1361 = vmatpush.msra.mxu0 %v39
  %1362 = vmatpush.msra.mxu0 %v38
  %1363 = vmatpush.msra.mxu0 %v37
  %1364 = vmatpush.msra.mxu0 %v36
  %1365 = vmatmul.f32.gmra.mxu0 %v1338
  %v1366 = vpop.f32.mrf.mxu0
  %v1367 = vadd.f32 0.0, %v1366
  %1368 = vmatmul.f32.gmra.mxu0 %v1341
  %v1369 = vpop.f32.mrf.mxu0
  %v1370 = vadd.f32 0.0, %v1369
  %1371 = vmatmul.f32.gmra.mxu0 %v1344
  %v1372 = vpop.f32.mrf.mxu0
  %v1373 = vadd.f32 0.0, %v1372
  %1374 = vmatmul.f32.gmra.mxu0 %v1347
  %v1375 = vpop.f32.mrf.mxu0
  %v1376 = vadd.f32 0.0, %v1375
  %1377 = vdwg.mxu0
  %v1378 = vadd.f32 %v1333, %v1367
  %v1379 = vadd.f32 %v1334, %v1370
  %v1380 = vadd.f32 %v1335, %v1373
  %v1381 = vadd.f32 %v1336, %v1376
  %v1383 = vsel %vm277, %v1236, 0
  %v1386 = vsel %vm277, %v1239, 0
  %v1389 = vsel %vm277, %v1242, 0
  %v1392 = vsel %vm277, %v1245, 0
  %1394 = vmatpush.msra.mxu0 0.0
  %1395 = vmatpush.msra.mxu0 0.0
  %1396 = vmatpush.msra.mxu0 0.0
  %1397 = vmatpush.msra.mxu0 0.0
  %1398 = vmatpush.msra.mxu0 0.0
  %1399 = vmatpush.msra.mxu0 0.0
  %1400 = vmatpush.msra.mxu0 0.0
  %1401 = vmatpush.msra.mxu0 0.0
  %1402 = vmatpush.msra.mxu0 0.0
  %1403 = vmatpush.msra.mxu0 0.0
  %1404 = vmatpush.msra.mxu0 0.0
  %1405 = vmatpush.msra.mxu0 0.0
  %1406 = vmatpush.msra.mxu0 %v43
  %1407 = vmatpush.msra.mxu0 %v42
  %1408 = vmatpush.msra.mxu0 %v41
  %1409 = vmatpush.msra.mxu0 %v40
  %1410 = vmatmul.f32.gmra.mxu0 %v1383
  %v1411 = vpop.f32.mrf.mxu0
  %v1412 = vadd.f32 0.0, %v1411
  %1413 = vmatmul.f32.gmra.mxu0 %v1386
  %v1414 = vpop.f32.mrf.mxu0
  %v1415 = vadd.f32 0.0, %v1414
  %1416 = vmatmul.f32.gmra.mxu0 %v1389
  %v1417 = vpop.f32.mrf.mxu0
  %v1418 = vadd.f32 0.0, %v1417
  %1419 = vmatmul.f32.gmra.mxu0 %v1392
  %v1420 = vpop.f32.mrf.mxu0
  %v1421 = vadd.f32 0.0, %v1420
  %1422 = vdwg.mxu0
  %v1423 = vadd.f32 %v1378, %v1412
  %v1424 = vadd.f32 %v1379, %v1415
  %v1425 = vadd.f32 %v1380, %v1418
  %v1426 = vadd.f32 %v1381, %v1421
  %1428 = vset.pattern.permute.xlu0 0
  %1429 = vperm.xlu0 %1428, %v56
  %v1430 = vpop.permute.xlu0 %1429
  %1433 = vset.pattern.permute.xlu0 0
  %1434 = vperm.xlu0 %1433, %v57
  %v1435 = vpop.permute.xlu0 %1434
  %1438 = vset.pattern.permute.xlu0 0
  %1439 = vperm.xlu0 %1438, %v58
  %v1440 = vpop.permute.xlu0 %1439
  %1443 = vset.pattern.permute.xlu0 0
  %1444 = vperm.xlu0 %1443, %v59
  %v1445 = vpop.permute.xlu0 %1444
  %v1447 = vadd.f32 %v1423, %v1430
  %v1448 = vadd.f32 %v1424, %v1435
  %v1449 = vadd.f32 %v1425, %v1440
  %v1450 = vadd.f32 %v1426, %v1445
  %1451 = vmatpush.msra.mxu0 0.0
  %1452 = vmatpush.msra.mxu0 0.0
  %1453 = vmatpush.msra.mxu0 0.0
  %1454 = vmatpush.msra.mxu0 0.0
  %1455 = vmatpush.msra.mxu0 0.0
  %1456 = vmatpush.msra.mxu0 0.0
  %1457 = vmatpush.msra.mxu0 0.0
  %1458 = vmatpush.msra.mxu0 0.0
  %1459 = vmatpush.msra.mxu0 0.0
  %1460 = vmatpush.msra.mxu0 0.0
  %1461 = vmatpush.msra.mxu0 0.0
  %1462 = vmatpush.msra.mxu0 0.0
  %1463 = vmatpush.msra.mxu0 %v1450
  %1464 = vmatpush.msra.mxu0 %v1449
  %1465 = vmatpush.msra.mxu0 %v1448
  %1466 = vmatpush.msra.mxu0 %v1447
  %1467 = vmatmul.f32.gmra.mxu0 %v676
  %v1468 = vpop.f32.mrf.mxu0
  %v1469 = vadd.f32 0.0, %v1468
  %1470 = vdwg.mxu0
  %v1471 = vmul.f32 %v1447, %v1447
  %v1472 = vmul.f32 %v1448, %v1448
  %v1473 = vmul.f32 %v1449, %v1449
  %v1474 = vmul.f32 %v1450, %v1450
  %1475 = vmatpush.msra.mxu0 0.0
  %1476 = vmatpush.msra.mxu0 0.0
  %1477 = vmatpush.msra.mxu0 0.0
  %1478 = vmatpush.msra.mxu0 0.0
  %1479 = vmatpush.msra.mxu0 0.0
  %1480 = vmatpush.msra.mxu0 0.0
  %1481 = vmatpush.msra.mxu0 0.0
  %1482 = vmatpush.msra.mxu0 0.0
  %1483 = vmatpush.msra.mxu0 0.0
  %1484 = vmatpush.msra.mxu0 0.0
  %1485 = vmatpush.msra.mxu0 0.0
  %1486 = vmatpush.msra.mxu0 0.0
  %1487 = vmatpush.msra.mxu0 %v1474
  %1488 = vmatpush.msra.mxu0 %v1473
  %1489 = vmatpush.msra.mxu0 %v1472
  %1490 = vmatpush.msra.mxu0 %v1471
  %1491 = vmatmul.f32.gmra.mxu0 %v676
  %v1492 = vpop.f32.mrf.mxu0
  %v1493 = vadd.f32 0.0, %v1492
  %1494 = vdwg.mxu0
  %v1496 = vsel %vm277, %v1469, 0
  %v1499 = vsel %vm277, %v1493, 0
  %1501 = vmatpush.msra.mxu0 0.0
  %1502 = vmatpush.msra.mxu0 0.0
  %1503 = vmatpush.msra.mxu0 0.0
  %1504 = vmatpush.msra.mxu0 0.0
  %1505 = vmatpush.msra.mxu0 0.0
  %1506 = vmatpush.msra.mxu0 0.0
  %1507 = vmatpush.msra.mxu0 0.0
  %1508 = vmatpush.msra.mxu0 0.0
  %1509 = vmatpush.msra.mxu0 0.0
  %1510 = vmatpush.msra.mxu0 0.0
  %1511 = vmatpush.msra.mxu0 0.0
  %1512 = vmatpush.msra.mxu0 0.0
  %1513 = vmatpush.msra.mxu0 %v18
  %1514 = vmatpush.msra.mxu0 %v17
  %1515 = vmatpush.msra.mxu0 %v16
  %1516 = vmatpush.msra.mxu0 %v15
  %1517 = vmatmul.f32.gmra.mxu0 %v1496
  %v1518 = vpop.f32.mrf.mxu0
  %v1519 = vadd.f32 0.0, %v1518
  %1520 = vmatmul.f32.gmra.mxu0 %v1499
  %v1521 = vpop.f32.mrf.mxu0
  %v1522 = vadd.f32 0.0, %v1521
  %1523 = vdwg.mxu0
  %v1524 = vmul.f32 %v1519, 0.015625
  %v1525 = vmul.f32 %v1522, 0.015625
  %v1526 = vmul.f32 %v1524, %v1524
  %v1527 = vsub.f32 %v1525, %v1526
  %v1528 = vadd.f32 %v1527, 1e-05
  %v1529 = vrsqrt.pop %v1528
  %v1530 = vmul.f32 %v1529, %v1528
  %v1531 = vmul.f32 %v1530, %v1529
  %v1532 = vmul.f32 0.5, %v1531
  %v1533 = vsub.f32 1.5, %v1532
  %v1534 = vmul.f32 %v1529, %v1533
  %vm1535 = vweird.f32 %v1528
  %vm1536 = vweird.f32 %v1529
  %vm1537 = vmor %vm1535, %vm1536
  %v1538 = vsel %vm1537, %v1529, %v1534
  %v1539 = vmul.f32 %v1524, %v1538
  %1540 = vmatpush.msra.mxu0 0.0
  %1541 = vmatpush.msra.mxu0 0.0
  %1542 = vmatpush.msra.mxu0 0.0
  %1543 = vmatpush.msra.mxu0 0.0
  %1544 = vmatpush.msra.mxu0 0.0
  %1545 = vmatpush.msra.mxu0 0.0
  %1546 = vmatpush.msra.mxu0 0.0
  %1547 = vmatpush.msra.mxu0 0.0
  %1548 = vmatpush.msra.mxu0 0.0
  %1549 = vmatpush.msra.mxu0 0.0
  %1550 = vmatpush.msra.mxu0 0.0
  %1551 = vmatpush.msra.mxu0 0.0
  %1552 = vmatpush.msra.mxu0 0.0
  %1553 = vmatpush.msra.mxu0 0.0
  %1554 = vmatpush.msra.mxu0 %v1539
  %1555 = vmatpush.msra.mxu0 %v1538
  %1556 = vmatmul.f32.gmra.mxu0 %v768
  %v1557 = vpop.f32.mrf.mxu0
  %v1558 = vadd.f32 0.0, %v1557
  %1559 = vmatmul.f32.gmra.mxu0 %v771
  %v1560 = vpop.f32.mrf.mxu0
  %v1561 = vadd.f32 0.0, %v1560
  %1562 = vmatmul.f32.gmra.mxu0 %v774
  %v1563 = vpop.f32.mrf.mxu0
  %v1564 = vadd.f32 0.0, %v1563
  %1565 = vmatmul.f32.gmra.mxu0 %v777
  %v1566 = vpop.f32.mrf.mxu0
  %v1567 = vadd.f32 0.0, %v1566
  %1568 = vmatmul.f32.gmra.mxu0 %v780
  %v1569 = vpop.f32.mrf.mxu0
  %v1570 = vadd.f32 0.0, %v1569
  %1571 = vmatmul.f32.gmra.mxu0 %v783
  %v1572 = vpop.f32.mrf.mxu0
  %v1573 = vadd.f32 0.0, %v1572
  %1574 = vmatmul.f32.gmra.mxu0 %v786
  %v1575 = vpop.f32.mrf.mxu0
  %v1576 = vadd.f32 0.0, %v1575
  %1577 = vmatmul.f32.gmra.mxu0 %v789
  %v1578 = vpop.f32.mrf.mxu0
  %v1579 = vadd.f32 0.0, %v1578
  %1580 = vdwg.mxu0
  %1582 = vset.pattern.permute.xlu0 0
  %1583 = vperm.xlu0 %1582, %v60
  %v1584 = vpop.permute.xlu0 %1583
  %1587 = vset.pattern.permute.xlu0 0
  %1588 = vperm.xlu0 %1587, %v61
  %v1589 = vpop.permute.xlu0 %1588
  %1592 = vset.pattern.permute.xlu0 0
  %1593 = vperm.xlu0 %1592, %v62
  %v1594 = vpop.permute.xlu0 %1593
  %1597 = vset.pattern.permute.xlu0 0
  %1598 = vperm.xlu0 %1597, %v63
  %v1599 = vpop.permute.xlu0 %1598
  %v1601 = vmul.f32 %v1558, %v1584
  %v1602 = vmul.f32 %v1561, %v1589
  %v1603 = vmul.f32 %v1564, %v1594
  %v1604 = vmul.f32 %v1567, %v1599
  %v1605 = vmul.f32 %v1570, %v1584
  %v1606 = vmul.f32 %v1573, %v1589
  %v1607 = vmul.f32 %v1576, %v1594
  %v1608 = vmul.f32 %v1579, %v1599
  %1610 = vset.pattern.permute.xlu0 0
  %1611 = vperm.xlu0 %1610, %v64
  %v1612 = vpop.permute.xlu0 %1611
  %1615 = vset.pattern.permute.xlu0 0
  %1616 = vperm.xlu0 %1615, %v65
  %v1617 = vpop.permute.xlu0 %1616
  %1620 = vset.pattern.permute.xlu0 0
  %1621 = vperm.xlu0 %1620, %v66
  %v1622 = vpop.permute.xlu0 %1621
  %1625 = vset.pattern.permute.xlu0 0
  %1626 = vperm.xlu0 %1625, %v67
  %v1627 = vpop.permute.xlu0 %1626
  %v1629 = vsub.f32 %v1612, %v1605
  %v1630 = vsub.f32 %v1617, %v1606
  %v1631 = vsub.f32 %v1622, %v1607
  %v1632 = vsub.f32 %v1627, %v1608
  %v1634 = vsel %vm884, %v1601, 0
  %v1637 = vsel %vm884, %v1602, 0
  %v1640 = vsel %vm884, %v1603, 0
  %v1643 = vsel %vm884, %v1604, 0
  %v1646 = vsel %vm884, %v1629, 0
  %v1649 = vsel %vm884, %v1630, 0
  %v1652 = vsel %vm884, %v1631, 0
  %v1655 = vsel %vm884, %v1632, 0
  %1657 = vmatpush.msra.mxu0 0.0
  %1658 = vmatpush.msra.mxu0 0.0
  %1659 = vmatpush.msra.mxu0 0.0
  %1660 = vmatpush.msra.mxu0 0.0
  %1661 = vmatpush.msra.mxu0 0.0
  %1662 = vmatpush.msra.mxu0 0.0
  %1663 = vmatpush.msra.mxu0 0.0
  %1664 = vmatpush.msra.mxu0 0.0
  %1665 = vmatpush.msra.mxu0 0.0
  %1666 = vmatpush.msra.mxu0 0.0
  %1667 = vmatpush.msra.mxu0 0.0
  %1668 = vmatpush.msra.mxu0 0.0
  %1669 = vmatpush.msra.mxu0 0.0
  %1670 = vmatpush.msra.mxu0 0.0
  %1671 = vmatpush.msra.mxu0 0.0
  %1672 = vmatpush.msra.mxu0 %v923
  %1673 = vmatmul.f32.gmra.mxu0 %v1634
  %v1674 = vpop.f32.mrf.mxu0
  %v1675 = vadd.f32 0.0, %v1674
  %1676 = vmatmul.f32.gmra.mxu0 %v1637
  %v1677 = vpop.f32.mrf.mxu0
  %v1678 = vadd.f32 0.0, %v1677
  %1679 = vmatmul.f32.gmra.mxu0 %v1640
  %v1680 = vpop.f32.mrf.mxu0
  %v1681 = vadd.f32 0.0, %v1680
  %1682 = vmatmul.f32.gmra.mxu0 %v1643
  %v1683 = vpop.f32.mrf.mxu0
  %v1684 = vadd.f32 0.0, %v1683
  %1685 = vmatmul.f32.gmra.mxu0 %v1646
  %v1686 = vpop.f32.mrf.mxu0
  %v1687 = vadd.f32 0.0, %v1686
  %1688 = vmatmul.f32.gmra.mxu0 %v1649
  %v1689 = vpop.f32.mrf.mxu0
  %v1690 = vadd.f32 0.0, %v1689
  %1691 = vmatmul.f32.gmra.mxu0 %v1652
  %v1692 = vpop.f32.mrf.mxu0
  %v1693 = vadd.f32 0.0, %v1692
  %1694 = vmatmul.f32.gmra.mxu0 %v1655
  %v1695 = vpop.f32.mrf.mxu0
  %v1696 = vadd.f32 0.0, %v1695
  %1697 = vdwg.mxu0
  %v1698 = vmul.f32 %v1447, %v1675
  %v1699 = vmul.f32 %v1448, %v1678
  %v1700 = vmul.f32 %v1449, %v1681
  %v1701 = vmul.f32 %v1450, %v1684
  %v1702 = vadd.f32 %v1698, %v1687
  %v1703 = vadd.f32 %v1699, %v1690
  %v1704 = vadd.f32 %v1700, %v1693
  %v1705 = vadd.f32 %v1701, %v1696
  %v1706 = vmin.f32 %v1702, 20.0
  %v1707 = vmin.f32 %v1703, 20.0
  %v1708 = vmin.f32 %v1704, 20.0
  %v1709 = vmin.f32 %v1705, 20.0
  %v1710 = vmul.f32 %v1706, 1.442695
  %v1711 = vpow.pop %v1710
  %v1712 = vmul.f32 %v1707, 1.442695
  %v1713 = vpow.pop %v1712
  %v1714 = vmul.f32 %v1708, 1.442695
  %v1715 = vpow.pop %v1714
  %v1716 = vmul.f32 %v1709, 1.442695
  %v1717 = vpow.pop %v1716
  %v1718 = vmul.f32 %v1711, %v1711
  %v1719 = vmul.f32 %v1713, %v1713
  %v1720 = vmul.f32 %v1715, %v1715
  %v1721 = vmul.f32 %v1717, %v1717
  %v1722 = vmul.f32 %v1711, 2.0
  %v1723 = vmul.f32 %v1713, 2.0
  %v1724 = vmul.f32 %v1715, 2.0
  %v1725 = vmul.f32 %v1717, 2.0
  %v1726 = vadd.f32 %v1718, %v1722
  %v1727 = vadd.f32 %v1719, %v1723
  %v1728 = vadd.f32 %v1720, %v1724
  %v1729 = vadd.f32 %v1721, %v1725
  %vm1730 = vcmp.gt.f32.partialorder %v1702, 20.0
  %vm1731 = vcmp.gt.f32.partialorder %v1703, 20.0
  %vm1732 = vcmp.gt.f32.partialorder %v1704, 20.0
  %vm1733 = vcmp.gt.f32.partialorder %v1705, 20.0
  %v1734 = vmul.f32 %v1702, %v1726
  %v1735 = vmul.f32 %v1703, %v1727
  %v1736 = vmul.f32 %v1704, %v1728
  %v1737 = vmul.f32 %v1705, %v1729
  %v1738 = vadd.f32 %v1726, 2.0
  %v1739 = vadd.f32 %v1727, 2.0
  %v1740 = vadd.f32 %v1728, 2.0
  %v1741 = vadd.f32 %v1729, 2.0
  %v1742 = vrcp.pop %v1738
  %v1743 = vmul.f32 %v1738, %v1742
  %v1744 = vsub.f32 1.0, %v1743
  %v1745 = vmul.f32 %v1742, %v1744
  %v1746 = vadd.f32 %v1742, %v1745
  %vm1747 = vweird.f32 %v1738
  %vm1748 = vweird.f32 %v1742
  %vm1749 = vmor %vm1747, %vm1748
  %v1750 = vsel %vm1749, %v1742, %v1746
  %v1751 = vand.u32 2147483647, %v1738
  %vm1752 = vcmp.eq.f32.partialorder %v1751, 8.507059e+37
  %v1753 = vand.u32 %v1738, 2147483648
  %v1754 = vor.u32 1.1754944e-38, %v1753
  %v1755 = vsel %vm1752, %v1754, %v1750
  %v1756 = vmul.f32 %v1734, %v1755
  %v1757 = vrcp.pop %v1739
  %v1758 = vmul.f32 %v1739, %v1757
  %v1759 = vsub.f32 1.0, %v1758
  %v1760 = vmul.f32 %v1757, %v1759
  %v1761 = vadd.f32 %v1757, %v1760
  %vm1762 = vweird.f32 %v1739
  %vm1763 = vweird.f32 %v1757
  %vm1764 = vmor %vm1762, %vm1763
  %v1765 = vsel %vm1764, %v1757, %v1761
  %v1766 = vand.u32 2147483647, %v1739
  %vm1767 = vcmp.eq.f32.partialorder %v1766, 8.507059e+37
  %v1768 = vand.u32 %v1739, 2147483648
  %v1769 = vor.u32 1.1754944e-38, %v1768
  %v1770 = vsel %vm1767, %v1769, %v1765
  %v1771 = vmul.f32 %v1735, %v1770
  %v1772 = vrcp.pop %v1740
  %v1773 = vmul.f32 %v1740, %v1772
  %v1774 = vsub.f32 1.0, %v1773
  %v1775 = vmul.f32 %v1772, %v1774
  %v1776 = vadd.f32 %v1772, %v1775
  %vm1777 = vweird.f32 %v1740
  %vm1778 = vweird.f32 %v1772
  %vm1779 = vmor %vm1777, %vm1778
  %v1780 = vsel %vm1779, %v1772, %v1776
  %v1781 = vand.u32 2147483647, %v1740
  %vm1782 = vcmp.eq.f32.partialorder %v1781, 8.507059e+37
  %v1783 = vand.u32 %v1740, 2147483648
  %v1784 = vor.u32 1.1754944e-38, %v1783
  %v1785 = vsel %vm1782, %v1784, %v1780
  %v1786 = vmul.f32 %v1736, %v1785
  %v1787 = vrcp.pop %v1741
  %v1788 = vmul.f32 %v1741, %v1787
  %v1789 = vsub.f32 1.0, %v1788
  %v1790 = vmul.f32 %v1787, %v1789
  %v1791 = vadd.f32 %v1787, %v1790
  %vm1792 = vweird.f32 %v1741
  %vm1793 = vweird.f32 %v1787
  %vm1794 = vmor %vm1792, %vm1793
  %v1795 = vsel %vm1794, %v1787, %v1791
  %v1796 = vand.u32 2147483647, %v1741
  %vm1797 = vcmp.eq.f32.partialorder %v1796, 8.507059e+37
  %v1798 = vand.u32 %v1741, 2147483648
  %v1799 = vor.u32 1.1754944e-38, %v1798
  %v1800 = vsel %vm1797, %v1799, %v1795
  %v1801 = vmul.f32 %v1737, %v1800
  %v1802 = vsel %vm1730, %v1702, %v1756
  %v1803 = vsel %vm1731, %v1703, %v1771
  %v1804 = vsel %vm1732, %v1704, %v1786
  %v1805 = vsel %vm1733, %v1705, %v1801
  %v1806 = vadd.f32 %v1802, %v502
  %v1807 = vadd.f32 %v1803, %v503
  %v1808 = vadd.f32 %v1804, %v504
  %v1809 = vadd.f32 %v1805, %v505
  %1810 = vst.msk [vmem:[%s3] sm:$0xff] %vm89, %v1806
  %1811 = vst.msk [vmem:[%s3 + $0x8] sm:$0xff] %vm89, %v1807
  %1812 = vst.msk [vmem:[%s3 + $0x10] sm:$0xff] %vm89, %v1808
  %1813 = vst.msk [vmem:[%s3 + $0x18] sm:$0xff] %vm89, %v1809
  %1818 = vrot.lane.b32.xlu0 %v1806, 112
  %v1819 = vpop.permute.xlu0 %1818
  %1820 = vrot.lane.b32.xlu0 %v1807, 112
  %v1821 = vpop.permute.xlu0 %1820
  %1822 = vrot.lane.b32.xlu0 %v1808, 112
  %v1823 = vpop.permute.xlu0 %1822
  %1824 = vrot.lane.b32.xlu0 %v1809, 112
  %v1825 = vpop.permute.xlu0 %1824
  %s1830 = scalar_lea.vmem %s3, 32
  %1831 = vst.msk [vmem:[%s1830] sm:$0xff] %vm89, %v1819
  %1832 = vst.msk [vmem:[%s1830 + $0x8] sm:$0xff] %vm89, %v1821
  %1833 = vst.msk [vmem:[%s1830 + $0x10] sm:$0xff] %vm89, %v1823
  %1834 = vst.msk [vmem:[%s1830 + $0x18] sm:$0xff] %vm89, %v1825
  // Predicated region
  $region14: #{residual_temporal_block.1} parent=0 // pred_check
    _
  $region15: #{residual_temporal_block.1} parent=0 // pred_check_branch
    %1836 = sbr.rel (0) target = $region17
  $region16: #{residual_temporal_block.1} parent=0 // pred_region
    _
  $region17: #{residual_temporal_block.1} parent=0 // pred_fallthru
    _
  // Predicated region
  $region18: #{residual_temporal_block.1} parent=0 // pred_check
    _
  $region19: #{residual_temporal_block.1} parent=0 // pred_check_branch
    %1838 = sbr.rel (0) target = $region21
  $region20: #{residual_temporal_block.1} parent=0 // pred_region
    _
  $region21: #{residual_temporal_block.1} parent=0 // pred_fallthru
    _

</llo_original>
